<compile_context>
chip_gen: v6e
topology: v6e:2x2x1
jax: 0.10.0
libtpu: 0.0.40
codegen_flags: <defaults>
</compile_context>

<pallas_src>
import jax
import jax.numpy as jnp
import numpy as np
from jax.experimental import pallas as pl
from jax.experimental.pallas import tpu as pltpu

EPS = 1e-5

_HAS_BUFFERED = hasattr(pl, "Buffered")


def _round_up(x, m):
    return (x + m - 1) // m * m


def _layernorm(x, w, b):
    mu = jnp.mean(x, axis=-1, keepdims=True)
    xc = x - mu
    var = jnp.mean(xc * xc, axis=-1, keepdims=True)
    return xc * jax.lax.rsqrt(var + EPS) * w + b


def _spec(shape, index_map, buffers=None):
    """BlockSpec with optional explicit buffer count (graceful fallback)."""
    if buffers is None or not _HAS_BUFFERED:
        return pl.BlockSpec(shape, index_map)
    try:
        return pl.BlockSpec(shape, index_map, pipeline_mode=pl.Buffered(buffers))
    except TypeError:  # older API without pipeline_mode kwarg
        return pl.BlockSpec(shape, index_map)


def _make_block_kernel(has_residual: bool):
    def kernel(*refs):
        if has_residual:
            x_ref, res_ref = refs[:2]
            rest = refs[2:]
        else:
            x_ref = refs[0]
            res_ref = None
            rest = refs[1:]
        (ln1w_ref, ln1b_ref, wmix_ref, bmix_ref, ln2w_ref, ln2b_ref,
         w1_ref, b1_ref, w2_ref, b2_ref,
         h_out_ref, res_out_ref,
         h2_scr, acc_scr) = rest

        j = pl.program_id(1)

        # --- pre-MLP part (add -> LN -> mixer -> add -> LN), once per token
        # tile on the first Dh step. residual2 goes straight into the resident
        # res_out output block (its index map ignores j), no extra scratch.
        @pl.when(j == 0)
        def _():
            x = x_ref[...].astype(jnp.float32)
            if has_residual:
                residual = x + res_ref[...].astype(jnp.float32)
            else:
                residual = x
            # hidden_states = norm(residual)
            h = _layernorm(residual, ln1w_ref[...], ln1b_ref[...])
            # hidden_states = mixer(hidden_states)  (dense mixer on the MXU)
            h = jnp.dot(h.astype(wmix_ref.dtype), wmix_ref[...],
                        preferred_element_type=jnp.float32) + bmix_ref[...]
            # residual = hidden_states + residual
            residual2 = h + residual
            res_out_ref[...] = residual2.astype(res_out_ref.dtype)
            # hidden_states = norm2(residual)
            h2_scr[...] = _layernorm(residual2, ln2w_ref[...],
                                     ln2b_ref[...]).astype(h2_scr.dtype)

        # --- MLP, tiled over the hidden dim Dh (streamed w1/w2 tiles) --------
        z = jnp.dot(h2_scr[...], w1_ref[...],
                    preferred_element_type=jnp.float32) + b1_ref[...]
        z = jax.nn.gelu(z, approximate=True)
        partial = jnp.dot(z.astype(w2_ref.dtype), w2_ref[...],
                          preferred_element_type=jnp.float32)

        @pl.when(j == 0)
        def _():
            acc_scr[...] = partial              # no explicit zero-fill pass

        @pl.when(j > 0)
        def _():
            acc_scr[...] = acc_scr[...] + partial

        # --- finalize on last Dh tile ----------------------------------------
        @pl.when(j == pl.num_programs(1) - 1)
        def _():
            h_out_ref[...] = (acc_scr[...] + b2_ref[...]).astype(h_out_ref.dtype)

    return kernel


def _vmem_estimate(tm, D, tdh, has_residual, x_bytes, res_bytes, out_bytes, wbuf):
    """VMEM footprint matching the actual pipeline buffering."""
    f32, bf16 = 4, 2
    n = 2 * tm * D * x_bytes                        # x tile (double-buffered)
    if has_residual:
        n += 2 * tm * D * res_bytes                 # residual tile
    n += D * D * bf16                               # wmix (single-buffered const)
    n += 6 * D * f32                                # LN w/b, bmix, b2 (consts)
    n += wbuf * (2 * D * tdh * bf16 + tdh * f32)    # streamed w1/w2 tiles + b1
    n += 2 * tm * D * (out_bytes + f32)             # h_out + res_out blocks
    n += tm * D * (bf16 + f32)                      # scratch: h2 + f32 acc
    return n


def mamba_block_forward(hidden_states, residual, params, *,
                        tm=512, tdh=512, out_dtype=jnp.bfloat16,
                        weight_buffers=2):
    """hidden_states: (B, L, D) any float dtype; residual: (B, L, D) or None.

    Returns (hidden_states_out[out_dtype], residual_out[f32]) as in Block.forward.
    """
    B, L, D = hidden_states.shape
    Dh = params["w1"].shape[1]
    assert D % 128 == 0, "feature dim must be a multiple of 128"
    assert Dh % 128 == 0, "MLP hidden dim must be a multiple of 128"

    N = B * L
    has_residual = residual is not None

    inputs = [hidden_states.reshape(N, D)]
    if has_residual:
        inputs.append(residual.reshape(N, D))

    x_bytes = jnp.dtype(hidden_states.dtype).itemsize
    res_bytes = jnp.dtype(residual.dtype).itemsize if has_residual else 0
    out_bytes = jnp.dtype(out_dtype).itemsize

    # ---- tiling: token tile (sublane) + MLP-hidden stream tile (lane) -------
    tm_eff = max(8, min(_round_up(tm, 8), _round_up(N, 8)))
    tdh_candidates = [t for t in range(128, Dh + 1, 128) if Dh % t == 0]
    tdh_eff = max(t for t in tdh_candidates if t <= max(tdh, 128))

    # ---- VMEM budget: stay within physical per-core VMEM (64 MiB on v7x) ----
    try:
        phys_vmem = pltpu.get_tpu_info().vmem_capacity_bytes
    except Exception:
        phys_vmem = 64 * 2**20          # conservative (v7x per-TC size)
    budget = max(phys_vmem - 16 * 2**20, 24 * 2**20)

    def est(tm_, tdh_):
        return _vmem_estimate(tm_, D, tdh_, has_residual,
                              x_bytes, res_bytes, out_bytes, weight_buffers)

    while est(tm_eff, tdh_eff) > budget:
        smaller = [t for t in tdh_candidates if t < tdh_eff]
        if smaller:
            tdh_eff = smaller[-1]
        elif tm_eff > 64:
            tm_eff = max(8, _round_up(tm_eff // 2, 8))
        else:
            break

    vmem_limit = int(min(budget,
                         max(int(est(tm_eff, tdh_eff) * 1.25) + (4 << 20),
                             32 * 2**20)))

    grid = (pl.cdiv(N, tm_eff), Dh // tdh_eff)

    row_spec = pl.BlockSpec((tm_eff, D), lambda i, j: (i, 0))

    def const(shape):
        return _spec(shape, lambda i, j: (0,) * len(shape), buffers=1)

    wbuf = None if weight_buffers == 2 else weight_buffers
    in_specs = [row_spec] + ([row_spec] if has_residual else []) + [
        const((1, D)), const((1, D)),                               # ln1 w, b
        const((D, D)), const((1, D)),                               # mixer W, b
        const((1, D)), const((1, D)),                               # ln2 w, b
        _spec((D, tdh_eff), lambda i, j: (0, j), buffers=wbuf),     # fc1 W tile
        _spec((1, tdh_eff), lambda i, j: (0, j), buffers=wbuf),     # fc1 b tile
        _spec((tdh_eff, D), lambda i, j: (j, 0), buffers=wbuf),     # fc2 W tile
        const((1, D)),                                              # fc2 b
    ]

    out_shapes = (jax.ShapeDtypeStruct((N, D), out_dtype),
                  jax.ShapeDtypeStruct((N, D), jnp.float32))
    out_specs = [pl.BlockSpec((tm_eff, D), lambda i, j: (i, 0)),
                 pl.BlockSpec((tm_eff, D), lambda i, j: (i, 0))]

    h_out, res_out = pl.pallas_call(
        _make_block_kernel(has_residual),
        out_shape=out_shapes,
        grid_spec=pltpu.PrefetchScalarGridSpec(
            num_scalar_prefetch=0,
            grid=grid,
            in_specs=in_specs,
            out_specs=out_specs,
            scratch_shapes=[
                pltpu.VMEM((tm_eff, D), jnp.bfloat16),   # h2 (MXU input)
                pltpu.VMEM((tm_eff, D), jnp.float32),    # MLP accumulator
            ],
        ),
        compiler_params=pltpu.CompilerParams(
            dimension_semantics=("parallel", "arbitrary"),
            vmem_limit_bytes=vmem_limit),
    )(*inputs,
      params["ln1_w"], params["ln1_b"],
      params["wmix"], params["bmix"],
      params["ln2_w"], params["ln2_b"],
      params["w1"], params["b1"],
      params["w2"], params["b2"])

    return h_out.reshape(B, L, D), res_out.reshape(B, L, D)


def make_params(dim, hidden, key):
    ks = jax.random.split(key, 6)
    s = 0.02
    return dict(
        ln1_w=jnp.ones((1, dim), jnp.float32),
        ln1_b=jnp.zeros((1, dim), jnp.float32),
        wmix=(s * jax.random.normal(ks[0], (dim, dim), jnp.float32)).astype(jnp.bfloat16),
        bmix=s * jax.random.normal(ks[1], (1, dim), jnp.float32),
        ln2_w=jnp.ones((1, dim), jnp.float32),
        ln2_b=jnp.zeros((1, dim), jnp.float32),
        w1=(s * jax.random.normal(ks[2], (dim, hidden), jnp.float32)).astype(jnp.bfloat16),
        b1=s * jax.random.normal(ks[3], (1, hidden), jnp.float32),
        w2=(s * jax.random.normal(ks[4], (hidden, dim), jnp.float32)).astype(jnp.bfloat16),
        b2=s * jax.random.normal(ks[5], (1, dim), jnp.float32),
    )


def reference_forward(x, residual, p):
    x = x.astype(jnp.float32)
    res = x if residual is None else x + residual.astype(jnp.float32)
    h = _layernorm(res, p["ln1_w"], p["ln1_b"])
    h = jnp.dot(h.astype(jnp.bfloat16), p["wmix"],
                preferred_element_type=jnp.float32) + p["bmix"]
    res2 = h + res
    h2 = _layernorm(res2, p["ln2_w"], p["ln2_b"])
    z = jnp.dot(h2.astype(jnp.bfloat16), p["w1"],
                preferred_element_type=jnp.float32) + p["b1"]
    z = jax.nn.gelu(z, approximate=True)
    out = jnp.dot(z.astype(jnp.bfloat16), p["w2"],
                  preferred_element_type=jnp.float32) + p["b2"]
    return out, res2


if __name__ == "__main__":
    B, L, D = 2, 128, 128
    HIDDEN = 4 * D   # 512

    key = jax.random.PRNGKey(0)
    kx, kr, kp = jax.random.split(key, 3)
    # hidden_states in bf16 (native activation dtype), residual carried in f32
    x = jax.random.normal(kx, (B, L, D), jnp.float32).astype(jnp.bfloat16)
    residual = jax.random.normal(kr, (B, L, D), jnp.float32)
    params = make_params(D, HIDDEN, kp)

    # Small tiles at test scale so both grid axes (token tile, Dh tile) are
    # exercised; real models use the larger defaults (tm=512, tdh=512).
    h_out, res_out = mamba_block_forward(x, residual, params, tm=64, tdh=256)
    h_out2, res_out2 = mamba_block_forward(x, None, params, tm=64, tdh=256)

    # Non-divisible token count -> exercises the masked partial last token tile
    # (no host-side padding/slicing anywhere).
    x3, r3 = x[:, :72], residual[:, :72]
    h_out3, res_out3 = mamba_block_forward(x3, r3, params, tm=64, tdh=256)

    jax.block_until_ready((h_out, res_out, h_out2, res_out2, h_out3, res_out3))

    h_ref, res_ref = reference_forward(x, residual, params)
    h_ref2, res_ref2 = reference_forward(x, None, params)
    h_ref3, res_ref3 = reference_forward(x3, r3, params)

    tol = dict(rtol=2e-2, atol=2e-2)
    np.testing.assert_allclose(np.asarray(h_out, np.float32), np.asarray(h_ref), **tol)
    np.testing.assert_allclose(np.asarray(res_out), np.asarray(res_ref), **tol)
    np.testing.assert_allclose(np.asarray(h_out2, np.float32), np.asarray(h_ref2), **tol)
    np.testing.assert_allclose(np.asarray(res_out2), np.asarray(res_ref2), **tol)
    np.testing.assert_allclose(np.asarray(h_out3, np.float32), np.asarray(h_ref3), **tol)
    np.testing.assert_allclose(np.asarray(res_out3), np.asarray(res_ref3), **tol)

    print("KERNEL_OK")
</pallas_src>

<mosaic_0001>
module attributes {stable_mosaic.version = 11 : i64} {
  func.func @kernel(%arg0: i32, %arg1: i32, %arg2: memref<64x128xbf16, #tpu.memory_space<vmem>>, %arg3: memref<64x128xf32, #tpu.memory_space<vmem>>, %arg4: memref<1x128xf32, #tpu.memory_space<vmem>>, %arg5: memref<1x128xf32, #tpu.memory_space<vmem>>, %arg6: memref<128x128xbf16, #tpu.memory_space<vmem>>, %arg7: memref<1x128xf32, #tpu.memory_space<vmem>>, %arg8: memref<1x128xf32, #tpu.memory_space<vmem>>, %arg9: memref<1x128xf32, #tpu.memory_space<vmem>>, %arg10: memref<128x256xbf16, #tpu.memory_space<vmem>>, %arg11: memref<1x256xf32, #tpu.memory_space<vmem>>, %arg12: memref<256x128xbf16, #tpu.memory_space<vmem>>, %arg13: memref<1x128xf32, #tpu.memory_space<vmem>>, %arg14: memref<64x128xbf16, #tpu.memory_space<vmem>>, %arg15: memref<64x128xf32, #tpu.memory_space<vmem>>, %arg16: memref<64x128xbf16, #tpu.memory_space<vmem>>, %arg17: memref<64x128xf32, #tpu.memory_space<vmem>>) attributes {dimension_semantics = [#tpu.dimension_semantics<parallel>, #tpu.dimension_semantics<arbitrary>], iteration_bounds = array<i64: 4, 2>, scalar_prefetch = 0 : i64, scratch_operands = 2 : i64, tpu.core_type = #tpu.core_type<tc>, window_params = [{transform_indices = @transform_0, window_bounds = array<i64: 64, 128>}, {transform_indices = @transform_1, window_bounds = array<i64: 64, 128>}, {pipeline_mode = #tpu.pipeline_mode<synchronous>, transform_indices = @transform_2, window_bounds = array<i64: 1, 128>}, {pipeline_mode = #tpu.pipeline_mode<synchronous>, transform_indices = @transform_3, window_bounds = array<i64: 1, 128>}, {pipeline_mode = #tpu.pipeline_mode<synchronous>, transform_indices = @transform_4, window_bounds = array<i64: 128, 128>}, {pipeline_mode = #tpu.pipeline_mode<synchronous>, transform_indices = @transform_5, window_bounds = array<i64: 1, 128>}, {pipeline_mode = #tpu.pipeline_mode<synchronous>, transform_indices = @transform_6, window_bounds = array<i64: 1, 128>}, {pipeline_mode = #tpu.pipeline_mode<synchronous>, transform_indices = @transform_7, window_bounds = array<i64: 1, 128>}, {transform_indices = @transform_8, window_bounds = array<i64: 128, 256>}, {transform_indices = @transform_9, window_bounds = array<i64: 1, 256>}, {transform_indices = @transform_10, window_bounds = array<i64: 256, 128>}, {pipeline_mode = #tpu.pipeline_mode<synchronous>, transform_indices = @transform_11, window_bounds = array<i64: 1, 128>}, {transform_indices = @transform_12, window_bounds = array<i64: 64, 128>}, {transform_indices = @transform_13, window_bounds = array<i64: 64, 128>}]} {
    %c0_i32 = arith.constant 0 : i32
    %0 = arith.cmpi eq, %arg1, %c0_i32 : i32
    %1 = arith.extui %0 : i1 to i32
    %c0_i32_0 = arith.constant 0 : i32
    %2 = arith.cmpi ne, %1, %c0_i32_0 : i32
    scf.if %2 {
      %c0_18 = arith.constant 0 : index
      %c0_19 = arith.constant 0 : index
      %34 = vector.load %arg2[%c0_18, %c0_19] : memref<64x128xbf16, #tpu.memory_space<vmem>>, vector<64x128xbf16>
      %35 = arith.extf %34 : vector<64x128xbf16> to vector<64x128xf32>
      %c0_20 = arith.constant 0 : index
      %c0_21 = arith.constant 0 : index
      %36 = vector.load %arg3[%c0_20, %c0_21] : memref<64x128xf32, #tpu.memory_space<vmem>>, vector<64x128xf32>
      %37 = arith.addf %35, %36 : vector<64x128xf32>
      %c0_22 = arith.constant 0 : index
      %c0_23 = arith.constant 0 : index
      %38 = vector.load %arg4[%c0_22, %c0_23] : memref<1x128xf32, #tpu.memory_space<vmem>>, vector<1x128xf32>
      %c0_24 = arith.constant 0 : index
      %c0_25 = arith.constant 0 : index
      %39 = vector.load %arg5[%c0_24, %c0_25] : memref<1x128xf32, #tpu.memory_space<vmem>>, vector<1x128xf32>
      %cst_26 = arith.constant dense<0.000000e+00> : vector<64xf32>
      %40 = vector.multi_reduction <add>, %37, %cst_26 [1] : vector<64x128xf32> to vector<64xf32>
      %41 = vector.shape_cast %40 : vector<64xf32> to vector<64x1xf32>
      %cst_27 = arith.constant 1.280000e+02 : f32
      %42 = vector.broadcast %cst_27 : f32 to vector<64x1xf32>
      %43 = arith.divf %41, %42 : vector<64x1xf32>
      %44 = vector.broadcast %43 : vector<64x1xf32> to vector<64x128xf32>
      %45 = arith.subf %37, %44 : vector<64x128xf32>
      %46 = arith.mulf %45, %45 : vector<64x128xf32>
      %cst_28 = arith.constant dense<0.000000e+00> : vector<64xf32>
      %47 = vector.multi_reduction <add>, %46, %cst_28 [1] : vector<64x128xf32> to vector<64xf32>
      %48 = vector.shape_cast %47 : vector<64xf32> to vector<64x1xf32>
      %cst_29 = arith.constant 1.280000e+02 : f32
      %49 = vector.broadcast %cst_29 : f32 to vector<64x1xf32>
      %50 = arith.divf %48, %49 : vector<64x1xf32>
      %cst_30 = arith.constant 9.99999974E-6 : f32
      %51 = vector.broadcast %cst_30 : f32 to vector<64x1xf32>
      %52 = arith.addf %50, %51 : vector<64x1xf32>
      %53 = math.rsqrt %52 : vector<64x1xf32>
      %54 = vector.broadcast %53 : vector<64x1xf32> to vector<64x128xf32>
      %55 = arith.mulf %45, %54 : vector<64x128xf32>
      %56 = vector.broadcast %38 : vector<1x128xf32> to vector<64x128xf32>
      %57 = arith.mulf %55, %56 : vector<64x128xf32>
      %58 = vector.broadcast %39 : vector<1x128xf32> to vector<64x128xf32>
      %59 = arith.addf %57, %58 : vector<64x128xf32>
      %60 = arith.truncf %59 : vector<64x128xf32> to vector<64x128xbf16>
      %c0_31 = arith.constant 0 : index
      %c0_32 = arith.constant 0 : index
      %61 = vector.load %arg6[%c0_31, %c0_32] : memref<128x128xbf16, #tpu.memory_space<vmem>>, vector<128x128xbf16>
      %cst_33 = arith.constant dense<0.000000e+00> : vector<64x128xf32>
      %62 = tpu.matmul %60, %61, %cst_33 {dimension_numbers = #tpu.dot_dimension_numbers<[1], [0], [0], [1], [0, 0, 1, 1], [], []>} : vector<64x128xbf16>, vector<128x128xbf16>, vector<64x128xf32> -> vector<64x128xf32>
      %c0_34 = arith.constant 0 : index
      %c0_35 = arith.constant 0 : index
      %63 = vector.load %arg7[%c0_34, %c0_35] : memref<1x128xf32, #tpu.memory_space<vmem>>, vector<1x128xf32>
      %64 = vector.broadcast %63 : vector<1x128xf32> to vector<64x128xf32>
      %65 = arith.addf %62, %64 : vector<64x128xf32>
      %66 = arith.addf %65, %37 : vector<64x128xf32>
      %c0_36 = arith.constant 0 : index
      %c0_37 = arith.constant 0 : index
      %67 = vector.load %arg15[%c0_36, %c0_37] : memref<64x128xf32, #tpu.memory_space<vmem>>, vector<64x128xf32>
      tpu.vector_store %arg15[%c0_36, %c0_37], %66 {strides = array<i32>} : memref<64x128xf32, #tpu.memory_space<vmem>>, vector<64x128xf32>,
      %c0_38 = arith.constant 0 : index
      %c0_39 = arith.constant 0 : index
      %68 = vector.load %arg8[%c0_38, %c0_39] : memref<1x128xf32, #tpu.memory_space<vmem>>, vector<1x128xf32>
      %c0_40 = arith.constant 0 : index
      %c0_41 = arith.constant 0 : index
      %69 = vector.load %arg9[%c0_40, %c0_41] : memref<1x128xf32, #tpu.memory_space<vmem>>, vector<1x128xf32>
      %cst_42 = arith.constant dense<0.000000e+00> : vector<64xf32>
      %70 = vector.multi_reduction <add>, %66, %cst_42 [1] : vector<64x128xf32> to vector<64xf32>
      %71 = vector.shape_cast %70 : vector<64xf32> to vector<64x1xf32>
      %cst_43 = arith.constant 1.280000e+02 : f32
      %72 = vector.broadcast %cst_43 : f32 to vector<64x1xf32>
      %73 = arith.divf %71, %72 : vector<64x1xf32>
      %74 = vector.broadcast %73 : vector<64x1xf32> to vector<64x128xf32>
      %75 = arith.subf %66, %74 : vector<64x128xf32>
      %76 = arith.mulf %75, %75 : vector<64x128xf32>
      %cst_44 = arith.constant dense<0.000000e+00> : vector<64xf32>
      %77 = vector.multi_reduction <add>, %76, %cst_44 [1] : vector<64x128xf32> to vector<64xf32>
      %78 = vector.shape_cast %77 : vector<64xf32> to vector<64x1xf32>
      %cst_45 = arith.constant 1.280000e+02 : f32
      %79 = vector.broadcast %cst_45 : f32 to vector<64x1xf32>
      %80 = arith.divf %78, %79 : vector<64x1xf32>
      %cst_46 = arith.constant 9.99999974E-6 : f32
      %81 = vector.broadcast %cst_46 : f32 to vector<64x1xf32>
      %82 = arith.addf %80, %81 : vector<64x1xf32>
      %83 = math.rsqrt %82 : vector<64x1xf32>
      %84 = vector.broadcast %83 : vector<64x1xf32> to vector<64x128xf32>
      %85 = arith.mulf %75, %84 : vector<64x128xf32>
      %86 = vector.broadcast %68 : vector<1x128xf32> to vector<64x128xf32>
      %87 = arith.mulf %85, %86 : vector<64x128xf32>
      %88 = vector.broadcast %69 : vector<1x128xf32> to vector<64x128xf32>
      %89 = arith.addf %87, %88 : vector<64x128xf32>
      %90 = arith.truncf %89 : vector<64x128xf32> to vector<64x128xbf16>
      %c0_47 = arith.constant 0 : index
      %c0_48 = arith.constant 0 : index
      %91 = vector.load %arg16[%c0_47, %c0_48] : memref<64x128xbf16, #tpu.memory_space<vmem>>, vector<64x128xbf16>
      tpu.vector_store %arg16[%c0_47, %c0_48], %90 {strides = array<i32>} : memref<64x128xbf16, #tpu.memory_space<vmem>>, vector<64x128xbf16>,
    } else {
    }
    %c0 = arith.constant 0 : index
    %c0_1 = arith.constant 0 : index
    %3 = vector.load %arg16[%c0, %c0_1] : memref<64x128xbf16, #tpu.memory_space<vmem>>, vector<64x128xbf16>
    %c0_2 = arith.constant 0 : index
    %c0_3 = arith.constant 0 : index
    %4 = vector.load %arg10[%c0_2, %c0_3] : memref<128x256xbf16, #tpu.memory_space<vmem>>, vector<128x256xbf16>
    %cst = arith.constant dense<0.000000e+00> : vector<64x256xf32>
    %5 = tpu.matmul %3, %4, %cst {dimension_numbers = #tpu.dot_dimension_numbers<[1], [0], [0], [1], [0, 0, 1, 1], [], []>} : vector<64x128xbf16>, vector<128x256xbf16>, vector<64x256xf32> -> vector<64x256xf32>
    %c0_4 = arith.constant 0 : index
    %c0_5 = arith.constant 0 : index
    %6 = vector.load %arg11[%c0_4, %c0_5] : memref<1x256xf32, #tpu.memory_space<vmem>>, vector<1x256xf32>
    %7 = vector.broadcast %6 : vector<1x256xf32> to vector<64x256xf32>
    %8 = arith.addf %5, %7 : vector<64x256xf32>
    %9 = arith.mulf %8, %8 : vector<64x256xf32>
    %10 = arith.mulf %8, %9 : vector<64x256xf32>
    %cst_6 = arith.constant 4.471500e-02 : f32
    %11 = vector.broadcast %cst_6 : f32 to vector<64x256xf32>
    %12 = arith.mulf %11, %10 : vector<64x256xf32>
    %13 = arith.addf %8, %12 : vector<64x256xf32>
    %cst_7 = arith.constant 0.797884583 : f32
    %14 = vector.broadcast %cst_7 : f32 to vector<64x256xf32>
    %15 = arith.mulf %14, %13 : vector<64x256xf32>
    %16 = math.tanh %15 : vector<64x256xf32>
    %cst_8 = arith.constant 1.000000e+00 : f32
    %17 = vector.broadcast %cst_8 : f32 to vector<64x256xf32>
    %18 = arith.addf %17, %16 : vector<64x256xf32>
    %cst_9 = arith.constant 5.000000e-01 : f32
    %19 = vector.broadcast %cst_9 : f32 to vector<64x256xf32>
    %20 = arith.mulf %19, %18 : vector<64x256xf32>
    %21 = arith.mulf %8, %20 : vector<64x256xf32>
    %22 = arith.truncf %21 : vector<64x256xf32> to vector<64x256xbf16>
    %c0_10 = arith.constant 0 : index
    %c0_11 = arith.constant 0 : index
    %23 = vector.load %arg12[%c0_10, %c0_11] : memref<256x128xbf16, #tpu.memory_space<vmem>>, vector<256x128xbf16>
    %cst_12 = arith.constant dense<0.000000e+00> : vector<64x128xf32>
    %24 = tpu.matmul %22, %23, %cst_12 {dimension_numbers = #tpu.dot_dimension_numbers<[1], [0], [0], [1], [0, 0, 1, 1], [], []>} : vector<64x256xbf16>, vector<256x128xbf16>, vector<64x128xf32> -> vector<64x128xf32>
    %c0_i32_13 = arith.constant 0 : i32
    %25 = arith.cmpi eq, %arg1, %c0_i32_13 : i32
    %26 = arith.extui %25 : i1 to i32
    %c0_i32_14 = arith.constant 0 : i32
    %27 = arith.cmpi ne, %26, %c0_i32_14 : i32
    scf.if %27 {
      %c0_18 = arith.constant 0 : index
      %c0_19 = arith.constant 0 : index
      %34 = vector.load %arg17[%c0_18, %c0_19] : memref<64x128xf32, #tpu.memory_space<vmem>>, vector<64x128xf32>
      tpu.vector_store %arg17[%c0_18, %c0_19], %24 {strides = array<i32>} : memref<64x128xf32, #tpu.memory_space<vmem>>, vector<64x128xf32>,
    } else {
    }
    %c0_i32_15 = arith.constant 0 : i32
    %28 = arith.cmpi sgt, %arg1, %c0_i32_15 : i32
    %29 = arith.extui %28 : i1 to i32
    %c0_i32_16 = arith.constant 0 : i32
    %30 = arith.cmpi ne, %29, %c0_i32_16 : i32
    scf.if %30 {
      %c0_18 = arith.constant 0 : index
      %c0_19 = arith.constant 0 : index
      %34 = vector.load %arg17[%c0_18, %c0_19] : memref<64x128xf32, #tpu.memory_space<vmem>>, vector<64x128xf32>
      %35 = arith.addf %34, %24 : vector<64x128xf32>
      %c0_20 = arith.constant 0 : index
      %c0_21 = arith.constant 0 : index
      %36 = vector.load %arg17[%c0_20, %c0_21] : memref<64x128xf32, #tpu.memory_space<vmem>>, vector<64x128xf32>
      tpu.vector_store %arg17[%c0_20, %c0_21], %35 {strides = array<i32>} : memref<64x128xf32, #tpu.memory_space<vmem>>, vector<64x128xf32>,
    } else {
    }
    %c1_i32 = arith.constant 1 : i32
    %31 = arith.cmpi eq, %arg1, %c1_i32 : i32
    %32 = arith.extui %31 : i1 to i32
    %c0_i32_17 = arith.constant 0 : i32
    %33 = arith.cmpi ne, %32, %c0_i32_17 : i32
    scf.if %33 {
      %c0_18 = arith.constant 0 : index
      %c0_19 = arith.constant 0 : index
      %34 = vector.load %arg17[%c0_18, %c0_19] : memref<64x128xf32, #tpu.memory_space<vmem>>, vector<64x128xf32>
      %c0_20 = arith.constant 0 : index
      %c0_21 = arith.constant 0 : index
      %35 = vector.load %arg13[%c0_20, %c0_21] : memref<1x128xf32, #tpu.memory_space<vmem>>, vector<1x128xf32>
      %36 = vector.broadcast %35 : vector<1x128xf32> to vector<64x128xf32>
      %37 = arith.addf %34, %36 : vector<64x128xf32>
      %38 = arith.truncf %37 : vector<64x128xf32> to vector<64x128xbf16>
      %c0_22 = arith.constant 0 : index
      %c0_23 = arith.constant 0 : index
      %39 = vector.load %arg14[%c0_22, %c0_23] : memref<64x128xbf16, #tpu.memory_space<vmem>>, vector<64x128xbf16>
      tpu.vector_store %arg14[%c0_22, %c0_23], %38 {strides = array<i32>} : memref<64x128xbf16, #tpu.memory_space<vmem>>, vector<64x128xbf16>,
    } else {
    }
    return
  }
  func.func @transform_0(%arg0: i32, %arg1: i32) -> (i32, i32) {
    %c0_i32 = arith.constant 0 : i32
    %c0_i32_0 = arith.constant 0 : i32
    return %arg0, %c0_i32 : i32, i32
  }
  func.func @transform_1(%arg0: i32, %arg1: i32) -> (i32, i32) {
    %c0_i32 = arith.constant 0 : i32
    %c0_i32_0 = arith.constant 0 : i32
    return %arg0, %c0_i32 : i32, i32
  }
  func.func @transform_2(%arg0: i32, %arg1: i32) -> (i32, i32) {
    %c0_i32 = arith.constant 0 : i32
    %c0_i32_0 = arith.constant 0 : i32
    %c0_i32_1 = arith.constant 0 : i32
    return %c0_i32, %c0_i32_0 : i32, i32
  }
  func.func @transform_3(%arg0: i32, %arg1: i32) -> (i32, i32) {
    %c0_i32 = arith.constant 0 : i32
    %c0_i32_0 = arith.constant 0 : i32
    %c0_i32_1 = arith.constant 0 : i32
    return %c0_i32, %c0_i32_0 : i32, i32
  }
  func.func @transform_4(%arg0: i32, %arg1: i32) -> (i32, i32) {
    %c0_i32 = arith.constant 0 : i32
    %c0_i32_0 = arith.constant 0 : i32
    %c0_i32_1 = arith.constant 0 : i32
    return %c0_i32, %c0_i32_0 : i32, i32
  }
  func.func @transform_5(%arg0: i32, %arg1: i32) -> (i32, i32) {
    %c0_i32 = arith.constant 0 : i32
    %c0_i32_0 = arith.constant 0 : i32
    %c0_i32_1 = arith.constant 0 : i32
    return %c0_i32, %c0_i32_0 : i32, i32
  }
  func.func @transform_6(%arg0: i32, %arg1: i32) -> (i32, i32) {
    %c0_i32 = arith.constant 0 : i32
    %c0_i32_0 = arith.constant 0 : i32
    %c0_i32_1 = arith.constant 0 : i32
    return %c0_i32, %c0_i32_0 : i32, i32
  }
  func.func @transform_7(%arg0: i32, %arg1: i32) -> (i32, i32) {
    %c0_i32 = arith.constant 0 : i32
    %c0_i32_0 = arith.constant 0 : i32
    %c0_i32_1 = arith.constant 0 : i32
    return %c0_i32, %c0_i32_0 : i32, i32
  }
  func.func @transform_8(%arg0: i32, %arg1: i32) -> (i32, i32) {
    %c0_i32 = arith.constant 0 : i32
    %c0_i32_0 = arith.constant 0 : i32
    return %c0_i32, %arg1 : i32, i32
  }
  func.func @transform_9(%arg0: i32, %arg1: i32) -> (i32, i32) {
    %c0_i32 = arith.constant 0 : i32
    %c0_i32_0 = arith.constant 0 : i32
    return %c0_i32, %arg1 : i32, i32
  }
  func.func @transform_10(%arg0: i32, %arg1: i32) -> (i32, i32) {
    %c0_i32 = arith.constant 0 : i32
    %c0_i32_0 = arith.constant 0 : i32
    return %arg1, %c0_i32 : i32, i32
  }
  func.func @transform_11(%arg0: i32, %arg1: i32) -> (i32, i32) {
    %c0_i32 = arith.constant 0 : i32
    %c0_i32_0 = arith.constant 0 : i32
    %c0_i32_1 = arith.constant 0 : i32
    return %c0_i32, %c0_i32_0 : i32, i32
  }
  func.func @transform_12(%arg0: i32, %arg1: i32) -> (i32, i32) {
    %c0_i32 = arith.constant 0 : i32
    %c0_i32_0 = arith.constant 0 : i32
    return %arg0, %c0_i32 : i32, i32
  }
  func.func @transform_13(%arg0: i32, %arg1: i32) -> (i32, i32) {
    %c0_i32 = arith.constant 0 : i32
    %c0_i32_0 = arith.constant 0 : i32
    return %arg0, %c0_i32 : i32, i32
  }
}

</mosaic_0001>

<llo_original>
// kernel: tpu_custom_call.1
$region0: #{tpu_custom_call.1}
  #allocation0 [shape = 'u32[]', space=smem, size = 0x4, offset = 0x4, fixed_abs, tag = 'smem constant byte address 0x4 - core index']
  #allocation1 [shape = 'u32[144,128]{1,0:T(1,128)}', space=vmem, size = 0x12000, scoped, tag = 'internal scratch']
  #allocation2 [shape = 'bf16[64,128]{1,0:T(8,128)(2,1)}', space=vmem, size = 0x4000, scoped, tag = 'scratch operand']
  #allocation3 [shape = 'f32[64,128]{1,0:T(8,128)}', space=vmem, size = 0x8000, scoped, tag = 'scratch operand']
  %s0 = inlined_call_operand.hbm [shape: bf16[256,128], index: 0, kind: input, shape index: {}]
  %s1 = inlined_call_operand.hbm [shape: f32[256,128], index: 1, kind: input, shape index: {}]
  %s2 = inlined_call_operand.vmem [shape: f32[1,128], index: 2, kind: input, shape index: {}]
  %s3 = inlined_call_operand.vmem [shape: f32[1,128], index: 3, kind: input, shape index: {}]
  %s4 = inlined_call_operand.hbm [shape: bf16[128,128], index: 4, kind: input, shape index: {}]
  %s5 = inlined_call_operand.vmem [shape: f32[1,128], index: 5, kind: input, shape index: {}]
  %s6 = inlined_call_operand.vmem [shape: f32[1,128], index: 6, kind: input, shape index: {}]
  %s7 = inlined_call_operand.vmem [shape: f32[1,128], index: 7, kind: input, shape index: {}]
  %s8 = inlined_call_operand.hbm [shape: bf16[128,512], index: 8, kind: input, shape index: {}]
  %s9 = inlined_call_operand.vmem [shape: f32[1,512], index: 9, kind: input, shape index: {}]
  %s10 = inlined_call_operand.hbm [shape: bf16[512,128], index: 10, kind: input, shape index: {}]
  %s11 = inlined_call_operand.vmem [shape: f32[1,128], index: 11, kind: input, shape index: {}]
  %s12 = inlined_call_operand.hbm [shape: bf16[256,128], index: 12, kind: output, shape index: {0}]
  %s13 = inlined_call_operand.hbm [shape: f32[256,128], index: 13, kind: output, shape index: {1}]
  %14 = xla_tuple %s12, %s13
  %s15 = sld [smem:[#allocation0]]
  $region125: #{tpu_custom_call.1} parent=0
    _
  %s17 = ssub.s32 1, %s15
  %s18 = scalar_select 0, %s17, %s15
  $region1: #{tpu_custom_call.1} parent=0
    #allocation4 [shape = 'u8[32768]{0}', space=vmem, size = 0x8000, scoped, tag = 'input window, operand 0']
    #allocation5 [shape = 's32[2]{0}', space=sflag, size = 0x8, scoped, tag = 'scoped memory for tpu_custom_call.1']
    #allocation6 [shape = 's32[2]{0}', space=sflag, size = 0x8, scoped, tag = 'scoped memory for tpu_custom_call.1']
    #allocation7 [shape = 'u8[65536]{0}', space=vmem, size = 0x10000, scoped, tag = 'input window, operand 1']
    #allocation8 [shape = 's32[2]{0}', space=sflag, size = 0x8, scoped, tag = 'scoped memory for tpu_custom_call.1']
    #allocation9 [shape = 'u8[32768]{0}', space=vmem, size = 0x8000, scoped, tag = 'input window, operand 4, single buffered']
    #allocation10 [shape = 'u8[131072]{0}', space=vmem, size = 0x20000, scoped, tag = 'input window, operand 8']
    #allocation11 [shape = 's32[2]{0}', space=sflag, size = 0x8, scoped, tag = 'scoped memory for tpu_custom_call.1']
    #allocation12 [shape = 'u8[131072]{0}', space=vmem, size = 0x20000, scoped, tag = 'input window, operand 10']
    #allocation13 [shape = 'u8[32768]{0}', space=vmem, size = 0x8000, scoped, tag = 'output window, operand 0']
    #allocation14 [shape = 'u8[65536]{0}', space=vmem, size = 0x10000, scoped, tag = 'output window, operand 1']
    #allocation15 [shape = 's32[2]{0}', space=sflag, size = 0x8, scoped, tag = 'scoped memory for tpu_custom_call.1']
    %19 = vsyncpa [#allocation5], 0
    %s20 = scalar_lea.sflag [#allocation5], 1
    %21 = vsyncpa %s20, 0
    %22 = vsyncpa [#allocation8], 0
    %s23 = scalar_lea.sflag [#allocation8], 1
    %24 = vsyncpa %s23, 0
    %25 = vsyncpa [#allocation11], 0
    %s26 = scalar_lea.sflag [#allocation11], 1
    %27 = vsyncpa %s26, 0
    %28 = vsyncpa [#allocation6], 0
    %s29 = scalar_lea.sflag [#allocation6], 1
    %30 = vsyncpa %s29, 0
    %31 = vsyncpa [#allocation15], 0
    %s32 = scalar_lea.sflag [#allocation15], 1
    %33 = vsyncpa %s32, 0
    loop: start=0, step=1, limit=10
    $region2: #{tpu_custom_call.1} parent=1 // loop_pre_header
      _
    $region3: #{tpu_custom_call.1} parent=1 // loop_header
      %s35 = sphi 0, %s39
      %p36 = scmp.ge.s32.totalorder %s35, 10
      %s42 = sphi 0, %s54
      %s43 = sphi 0, %s50
      %s44 = sphi 0, %s42
      %s45 = sphi 0, %s43
      %s46 = sphi 0, %s44
      %s47 = sphi 0, %s45
      %s57 = sphi 0, %s59
      %s60 = sphi 0, %s57
      %s61 = sphi 0, %s60
      %s77 = sphi 0, %s61
      %s83 = sphi 0, %s85
      %s86 = sphi 0, %s83
      %s87 = sphi 0, %s86
      %s103 = sphi 0, %s87
      %s107 = sphi 0, %s107
      %s109 = sphi 0, %s107
      %s110 = sphi 0, %s109
      %s124 = sphi 0, %s110
      %s128 = sphi 0, %s128
      %s130 = sphi 0, %s128
      %s131 = sphi 0, %s130
      %s145 = sphi 0, %s131
      %s149 = sphi 0, %s149
      %s151 = sphi 0, %s149
      %s152 = sphi 0, %s151
      %s166 = sphi 0, %s152
      %s170 = sphi 0, %s170
      %s172 = sphi 0, %s170
      %s173 = sphi 0, %s172
      %s187 = sphi 0, %s173
      %s191 = sphi 0, %s191
      %s193 = sphi 0, %s191
      %s194 = sphi 0, %s193
      %s208 = sphi 0, %s194
      %s212 = sphi 0, %s212
      %s214 = sphi 0, %s212
      %s215 = sphi 0, %s214
      %s229 = sphi 0, %s215
      %s235 = sphi 0, %s237
      %s238 = sphi 0, %s235
      %s239 = sphi 0, %s238
      %s255 = sphi 0, %s239
      %s261 = sphi 0, %s263
      %s264 = sphi 0, %s261
      %s265 = sphi 0, %s264
      %s281 = sphi 0, %s265
      %s287 = sphi 0, %s289
      %s290 = sphi 0, %s287
      %s291 = sphi 0, %s290
      %s307 = sphi 0, %s291
      %s311 = sphi 0, %s311
      %s313 = sphi 0, %s311
      %s314 = sphi 0, %s313
      %s328 = sphi 0, %s314
      %s334 = sphi 0, %s336
      %s337 = sphi 0, %s334
      %s338 = sphi 0, %s337
      %s354 = sphi 0, %s338
      %s360 = sphi 0, %s362
      %s363 = sphi 0, %s360
      %s364 = sphi 0, %s363
      %s380 = sphi 0, %s364
    $region4: #{tpu_custom_call.1} parent=1 // loop_header_branch
      %38 = sbr.rel (%p36) target = $region8
    $region5: #{tpu_custom_call.1} parent=1 // loop_body
      %s40 = ssub.s32 %s35, 1
      %s41 = ssub.s32 %s35, 2
      %s48 = sadd.s32 1, %s43
      %p49 = scmp.ge.s32.totalorder %s48, 2
      %s50 = scalar_select %p49, 0, %s48
      %s51 = sadd.s32 1, %s42
      %s52 = scalar_select %p49, %s51, %s42
      %p53 = scmp.ge.s32.totalorder %s52, 4
      %s54 = scalar_select %p53, 0, %s52
      %s55 = ssub.s32 %s42, %s54
      %p56 = scmp.eq.s32.totalorder %s55, 0
      %s58 = sadd.s32 %s57, 1
      %s59 = scalar_select %p56, %s57, %s58
      %p62 = pneg %p56
      %p63 = scmp.eq.s32.totalorder %s35, 7
      %p64 = por %p62, %p63
      %p65 = scmp.ne.s32.totalorder %s57, %s60
      %p66 = scmp.eq.s32.totalorder %s35, 0
      %p67 = por %p65, %p66
      %p68 = scmp.ne.s32.totalorder %s57, %s60
      %p69 = scmp.eq.s32.totalorder %s40, 7
      %p70 = por %p68, %p69
      %p71 = scmp.ne.s32.totalorder %s60, %s61
      %p72 = scmp.eq.s32.totalorder %s40, 0
      %p73 = por %p71, %p72
      %p74 = scmp.ne.s32.totalorder %s60, %s61
      %p75 = scmp.eq.s32.totalorder %s41, 7
      %p76 = por %p74, %p75
      %p78 = scmp.ne.s32.totalorder %s61, %s77
      %p79 = scmp.eq.s32.totalorder %s41, 0
      %p80 = por %p78, %p79
      %s81 = ssub.s32 %s42, %s54
      %p82 = scmp.eq.s32.totalorder %s81, 0
      %s84 = sadd.s32 %s83, 1
      %s85 = scalar_select %p82, %s83, %s84
      %p88 = pneg %p82
      %p89 = scmp.eq.s32.totalorder %s35, 7
      %p90 = por %p88, %p89
      %p91 = scmp.ne.s32.totalorder %s83, %s86
      %p92 = scmp.eq.s32.totalorder %s35, 0
      %p93 = por %p91, %p92
      %p94 = scmp.ne.s32.totalorder %s83, %s86
      %p95 = scmp.eq.s32.totalorder %s40, 7
      %p96 = por %p94, %p95
      %p97 = scmp.ne.s32.totalorder %s86, %s87
      %p98 = scmp.eq.s32.totalorder %s40, 0
      %p99 = por %p97, %p98
      %p100 = scmp.ne.s32.totalorder %s86, %s87
      %p101 = scmp.eq.s32.totalorder %s41, 7
      %p102 = por %p100, %p101
      %p104 = scmp.ne.s32.totalorder %s87, %s103
      %p105 = scmp.eq.s32.totalorder %s41, 0
      %p106 = por %p104, %p105
      %s108 = sadd.s32 %s107, 1
      %p111 = scmp.eq.s32.totalorder %s35, 7
      %p112 = scmp.ne.s32.totalorder %s107, %s109
      %p113 = scmp.eq.s32.totalorder %s35, 0
      %p114 = por %p112, %p113
      %p115 = scmp.ne.s32.totalorder %s107, %s109
      %p116 = scmp.eq.s32.totalorder %s40, 7
      %p117 = por %p115, %p116
      %p118 = scmp.ne.s32.totalorder %s109, %s110
      %p119 = scmp.eq.s32.totalorder %s40, 0
      %p120 = por %p118, %p119
      %p121 = scmp.ne.s32.totalorder %s109, %s110
      %p122 = scmp.eq.s32.totalorder %s41, 7
      %p123 = por %p121, %p122
      %p125 = scmp.ne.s32.totalorder %s110, %s124
      %p126 = scmp.eq.s32.totalorder %s41, 0
      %p127 = por %p125, %p126
      %s129 = sadd.s32 %s128, 1
      %p132 = scmp.eq.s32.totalorder %s35, 7
      %p133 = scmp.ne.s32.totalorder %s128, %s130
      %p134 = scmp.eq.s32.totalorder %s35, 0
      %p135 = por %p133, %p134
      %p136 = scmp.ne.s32.totalorder %s128, %s130
      %p137 = scmp.eq.s32.totalorder %s40, 7
      %p138 = por %p136, %p137
      %p139 = scmp.ne.s32.totalorder %s130, %s131
      %p140 = scmp.eq.s32.totalorder %s40, 0
      %p141 = por %p139, %p140
      %p142 = scmp.ne.s32.totalorder %s130, %s131
      %p143 = scmp.eq.s32.totalorder %s41, 7
      %p144 = por %p142, %p143
      %p146 = scmp.ne.s32.totalorder %s131, %s145
      %p147 = scmp.eq.s32.totalorder %s41, 0
      %p148 = por %p146, %p147
      %s150 = sadd.s32 %s149, 1
      %p153 = scmp.eq.s32.totalorder %s35, 7
      %p154 = scmp.ne.s32.totalorder %s149, %s151
      %p155 = scmp.eq.s32.totalorder %s35, 0
      %p156 = por %p154, %p155
      %p157 = scmp.ne.s32.totalorder %s149, %s151
      %p158 = scmp.eq.s32.totalorder %s40, 7
      %p159 = por %p157, %p158
      %p160 = scmp.ne.s32.totalorder %s151, %s152
      %p161 = scmp.eq.s32.totalorder %s40, 0
      %p162 = por %p160, %p161
      %p163 = scmp.ne.s32.totalorder %s151, %s152
      %p164 = scmp.eq.s32.totalorder %s41, 7
      %p165 = por %p163, %p164
      %p167 = scmp.ne.s32.totalorder %s152, %s166
      %p168 = scmp.eq.s32.totalorder %s41, 0
      %p169 = por %p167, %p168
      %s171 = sadd.s32 %s170, 1
      %p174 = scmp.eq.s32.totalorder %s35, 7
      %p175 = scmp.ne.s32.totalorder %s170, %s172
      %p176 = scmp.eq.s32.totalorder %s35, 0
      %p177 = por %p175, %p176
      %p178 = scmp.ne.s32.totalorder %s170, %s172
      %p179 = scmp.eq.s32.totalorder %s40, 7
      %p180 = por %p178, %p179
      %p181 = scmp.ne.s32.totalorder %s172, %s173
      %p182 = scmp.eq.s32.totalorder %s40, 0
      %p183 = por %p181, %p182
      %p184 = scmp.ne.s32.totalorder %s172, %s173
      %p185 = scmp.eq.s32.totalorder %s41, 7
      %p186 = por %p184, %p185
      %p188 = scmp.ne.s32.totalorder %s173, %s187
      %p189 = scmp.eq.s32.totalorder %s41, 0
      %p190 = por %p188, %p189
      %s192 = sadd.s32 %s191, 1
      %p195 = scmp.eq.s32.totalorder %s35, 7
      %p196 = scmp.ne.s32.totalorder %s191, %s193
      %p197 = scmp.eq.s32.totalorder %s35, 0
      %p198 = por %p196, %p197
      %p199 = scmp.ne.s32.totalorder %s191, %s193
      %p200 = scmp.eq.s32.totalorder %s40, 7
      %p201 = por %p199, %p200
      %p202 = scmp.ne.s32.totalorder %s193, %s194
      %p203 = scmp.eq.s32.totalorder %s40, 0
      %p204 = por %p202, %p203
      %p205 = scmp.ne.s32.totalorder %s193, %s194
      %p206 = scmp.eq.s32.totalorder %s41, 7
      %p207 = por %p205, %p206
      %p209 = scmp.ne.s32.totalorder %s194, %s208
      %p210 = scmp.eq.s32.totalorder %s41, 0
      %p211 = por %p209, %p210
      %s213 = sadd.s32 %s212, 1
      %p216 = scmp.eq.s32.totalorder %s35, 7
      %p217 = scmp.ne.s32.totalorder %s212, %s214
      %p218 = scmp.eq.s32.totalorder %s35, 0
      %p219 = por %p217, %p218
      %p220 = scmp.ne.s32.totalorder %s212, %s214
      %p221 = scmp.eq.s32.totalorder %s40, 7
      %p222 = por %p220, %p221
      %p223 = scmp.ne.s32.totalorder %s214, %s215
      %p224 = scmp.eq.s32.totalorder %s40, 0
      %p225 = por %p223, %p224
      %p226 = scmp.ne.s32.totalorder %s214, %s215
      %p227 = scmp.eq.s32.totalorder %s41, 7
      %p228 = por %p226, %p227
      %p230 = scmp.ne.s32.totalorder %s215, %s229
      %p231 = scmp.eq.s32.totalorder %s41, 0
      %p232 = por %p230, %p231
      %s233 = ssub.s32 %s43, %s50
      %p234 = scmp.eq.s32.totalorder %s233, 0
      %s236 = sadd.s32 %s235, 1
      %s237 = scalar_select %p234, %s235, %s236
      %p240 = pneg %p234
      %p241 = scmp.eq.s32.totalorder %s35, 7
      %p242 = por %p240, %p241
      %p243 = scmp.ne.s32.totalorder %s235, %s238
      %p244 = scmp.eq.s32.totalorder %s35, 0
      %p245 = por %p243, %p244
      %p246 = scmp.ne.s32.totalorder %s235, %s238
      %p247 = scmp.eq.s32.totalorder %s40, 7
      %p248 = por %p246, %p247
      %p249 = scmp.ne.s32.totalorder %s238, %s239
      %p250 = scmp.eq.s32.totalorder %s40, 0
      %p251 = por %p249, %p250
      %p252 = scmp.ne.s32.totalorder %s238, %s239
      %p253 = scmp.eq.s32.totalorder %s41, 7
      %p254 = por %p252, %p253
      %p256 = scmp.ne.s32.totalorder %s239, %s255
      %p257 = scmp.eq.s32.totalorder %s41, 0
      %p258 = por %p256, %p257
      %s259 = ssub.s32 %s43, %s50
      %p260 = scmp.eq.s32.totalorder %s259, 0
      %s262 = sadd.s32 %s261, 1
      %s263 = scalar_select %p260, %s261, %s262
      %p266 = pneg %p260
      %p267 = scmp.eq.s32.totalorder %s35, 7
      %p268 = por %p266, %p267
      %p269 = scmp.ne.s32.totalorder %s261, %s264
      %p270 = scmp.eq.s32.totalorder %s35, 0
      %p271 = por %p269, %p270
      %p272 = scmp.ne.s32.totalorder %s261, %s264
      %p273 = scmp.eq.s32.totalorder %s40, 7
      %p274 = por %p272, %p273
      %p275 = scmp.ne.s32.totalorder %s264, %s265
      %p276 = scmp.eq.s32.totalorder %s40, 0
      %p277 = por %p275, %p276
      %p278 = scmp.ne.s32.totalorder %s264, %s265
      %p279 = scmp.eq.s32.totalorder %s41, 7
      %p280 = por %p278, %p279
      %p282 = scmp.ne.s32.totalorder %s265, %s281
      %p283 = scmp.eq.s32.totalorder %s41, 0
      %p284 = por %p282, %p283
      %s285 = ssub.s32 %s43, %s50
      %p286 = scmp.eq.s32.totalorder %s285, 0
      %s288 = sadd.s32 %s287, 1
      %s289 = scalar_select %p286, %s287, %s288
      %p292 = pneg %p286
      %p293 = scmp.eq.s32.totalorder %s35, 7
      %p294 = por %p292, %p293
      %p295 = scmp.ne.s32.totalorder %s287, %s290
      %p296 = scmp.eq.s32.totalorder %s35, 0
      %p297 = por %p295, %p296
      %p298 = scmp.ne.s32.totalorder %s287, %s290
      %p299 = scmp.eq.s32.totalorder %s40, 7
      %p300 = por %p298, %p299
      %p301 = scmp.ne.s32.totalorder %s290, %s291
      %p302 = scmp.eq.s32.totalorder %s40, 0
      %p303 = por %p301, %p302
      %p304 = scmp.ne.s32.totalorder %s290, %s291
      %p305 = scmp.eq.s32.totalorder %s41, 7
      %p306 = por %p304, %p305
      %p308 = scmp.ne.s32.totalorder %s291, %s307
      %p309 = scmp.eq.s32.totalorder %s41, 0
      %p310 = por %p308, %p309
      %s312 = sadd.s32 %s311, 1
      %p315 = scmp.eq.s32.totalorder %s35, 7
      %p316 = scmp.ne.s32.totalorder %s311, %s313
      %p317 = scmp.eq.s32.totalorder %s35, 0
      %p318 = por %p316, %p317
      %p319 = scmp.ne.s32.totalorder %s311, %s313
      %p320 = scmp.eq.s32.totalorder %s40, 7
      %p321 = por %p319, %p320
      %p322 = scmp.ne.s32.totalorder %s313, %s314
      %p323 = scmp.eq.s32.totalorder %s40, 0
      %p324 = por %p322, %p323
      %p325 = scmp.ne.s32.totalorder %s313, %s314
      %p326 = scmp.eq.s32.totalorder %s41, 7
      %p327 = por %p325, %p326
      %p329 = scmp.ne.s32.totalorder %s314, %s328
      %p330 = scmp.eq.s32.totalorder %s41, 0
      %p331 = por %p329, %p330
      %s332 = ssub.s32 %s42, %s54
      %p333 = scmp.eq.s32.totalorder %s332, 0
      %s335 = sadd.s32 %s334, 1
      %s336 = scalar_select %p333, %s334, %s335
      %p339 = pneg %p333
      %p340 = scmp.eq.s32.totalorder %s35, 7
      %p341 = por %p339, %p340
      %p342 = scmp.ne.s32.totalorder %s334, %s337
      %p343 = scmp.eq.s32.totalorder %s35, 0
      %p344 = por %p342, %p343
      %p345 = scmp.ne.s32.totalorder %s334, %s337
      %p346 = scmp.eq.s32.totalorder %s40, 7
      %p347 = por %p345, %p346
      %p348 = scmp.ne.s32.totalorder %s337, %s338
      %p349 = scmp.eq.s32.totalorder %s40, 0
      %p350 = por %p348, %p349
      %p351 = scmp.ne.s32.totalorder %s337, %s338
      %p352 = scmp.eq.s32.totalorder %s41, 7
      %p353 = por %p351, %p352
      %p355 = scmp.ne.s32.totalorder %s338, %s354
      %p356 = scmp.eq.s32.totalorder %s41, 0
      %p357 = por %p355, %p356
      %s358 = ssub.s32 %s42, %s54
      %p359 = scmp.eq.s32.totalorder %s358, 0
      %s361 = sadd.s32 %s360, 1
      %s362 = scalar_select %p359, %s360, %s361
      %p365 = pneg %p359
      %p366 = scmp.eq.s32.totalorder %s35, 7
      %p367 = por %p365, %p366
      %p368 = scmp.ne.s32.totalorder %s360, %s363
      %p369 = scmp.eq.s32.totalorder %s35, 0
      %p370 = por %p368, %p369
      %p371 = scmp.ne.s32.totalorder %s360, %s363
      %p372 = scmp.eq.s32.totalorder %s40, 7
      %p373 = por %p371, %p372
      %p374 = scmp.ne.s32.totalorder %s363, %s364
      %p375 = scmp.eq.s32.totalorder %s40, 0
      %p376 = por %p374, %p375
      %p377 = scmp.ne.s32.totalorder %s363, %s364
      %p378 = scmp.eq.s32.totalorder %s41, 7
      %p379 = por %p377, %p378
      %p381 = scmp.ne.s32.totalorder %s364, %s380
      %p382 = scmp.eq.s32.totalorder %s41, 0
      %p383 = por %p381, %p382
      %p384 = scmp.le.s32.totalorder 1, %s35
      %p385 = scmp.lt.s32.totalorder %s35, 9
      %p386 = pnand %p384, %p385
      %p387 = pneg %p386
      // Predicated region
      $region9: #{tpu_custom_call.1} parent=5 // pred_check
        _
      $region10: #{tpu_custom_call.1} parent=5 // pred_check_branch
        %389 = sbr.rel (%p386) target = $region12
      $region11: #{tpu_custom_call.1} parent=5 // pred_region
        %s390 = ssub.s32 %s35, 1
        // Predicated region
        $region13: #{tpu_custom_call.1} parent=11 // pred_check
          %p391 = pneg %p120
        $region14: #{tpu_custom_call.1} parent=11 // pred_check_branch
          %393 = sbr.rel (%p391) target = $region16
        $region15: #{tpu_custom_call.1} parent=11 // pred_region
          _
        $region16: #{tpu_custom_call.1} parent=11 // pred_fallthru
          _
        // Predicated region
        $region17: #{tpu_custom_call.1} parent=11 // pred_check
          %p394 = pneg %p141
        $region18: #{tpu_custom_call.1} parent=11 // pred_check_branch
          %396 = sbr.rel (%p394) target = $region20
        $region19: #{tpu_custom_call.1} parent=11 // pred_region
          _
        $region20: #{tpu_custom_call.1} parent=11 // pred_fallthru
          _
        // Predicated region
        $region21: #{tpu_custom_call.1} parent=11 // pred_check
          %p397 = pneg %p162
        $region22: #{tpu_custom_call.1} parent=11 // pred_check_branch
          %399 = sbr.rel (%p397) target = $region24
        $region23: #{tpu_custom_call.1} parent=11 // pred_region
          %s401 = ssub.s32 1024, 1024
          %402 = vsyncadd [#allocation8], %s401
          %s403 = sshll.u32 [#allocation9], 4
          %s404 = int_to_ptr.vmem [resolvable:$true] %s403
          %409 = dma.hbm_to_vmem [thread:$0]  %s4, 1024, %s404, [#allocation8], 64, 64, 4
        $region24: #{tpu_custom_call.1} parent=11 // pred_fallthru
          _
        // Predicated region
        $region25: #{tpu_custom_call.1} parent=11 // pred_check
          %p410 = pneg %p183
        $region26: #{tpu_custom_call.1} parent=11 // pred_check_branch
          %412 = sbr.rel (%p410) target = $region28
        $region27: #{tpu_custom_call.1} parent=11 // pred_region
          _
        $region28: #{tpu_custom_call.1} parent=11 // pred_fallthru
          _
        // Predicated region
        $region29: #{tpu_custom_call.1} parent=11 // pred_check
          %p413 = pneg %p204
        $region30: #{tpu_custom_call.1} parent=11 // pred_check_branch
          %415 = sbr.rel (%p413) target = $region32
        $region31: #{tpu_custom_call.1} parent=11 // pred_region
          _
        $region32: #{tpu_custom_call.1} parent=11 // pred_fallthru
          _
        // Predicated region
        $region33: #{tpu_custom_call.1} parent=11 // pred_check
          %p416 = pneg %p225
        $region34: #{tpu_custom_call.1} parent=11 // pred_check_branch
          %418 = sbr.rel (%p416) target = $region36
        $region35: #{tpu_custom_call.1} parent=11 // pred_region
          _
        $region36: #{tpu_custom_call.1} parent=11 // pred_fallthru
          _
        // Predicated region
        $region37: #{tpu_custom_call.1} parent=11 // pred_check
          %p419 = pneg %p324
        $region38: #{tpu_custom_call.1} parent=11 // pred_check_branch
          %421 = sbr.rel (%p419) target = $region40
        $region39: #{tpu_custom_call.1} parent=11 // pred_region
          _
        $region40: #{tpu_custom_call.1} parent=11 // pred_fallthru
          _
      $region12: #{tpu_custom_call.1} parent=5 // pred_fallthru
        _
      %p422 = scmp.lt.s32.totalorder %s35, 8
      // Predicated region
      $region41: #{tpu_custom_call.1} parent=5 // pred_check
        %p423 = pneg %p422
      $region42: #{tpu_custom_call.1} parent=5 // pred_check_branch
        %425 = sbr.rel (%p423) target = $region44
      $region43: #{tpu_custom_call.1} parent=5 // pred_region
        // Predicated region
        $region45: #{tpu_custom_call.1} parent=43 // pred_check
          %p426 = pneg %p67
        $region46: #{tpu_custom_call.1} parent=43 // pred_check_branch
          %428 = sbr.rel (%p426) target = $region48
        $region47: #{tpu_custom_call.1} parent=43 // pred_region
          %s429 = sand.u32 %s57, 1
          %s430 = scalar_lea.sflag [#allocation5], %s429
          %s431 = sand.u32 %s57, 1
          %s432 = smul.addr %s431, 32
          %s433 = scalar_lea.vmem [#allocation4], %s432
          %s434 = smul.u32 8, %s42
          %s436 = ssub.s32 512, 512
          %437 = vsyncadd %s430, %s436
          %s438 = smul.addr %s434, 64
          %s439 = scalar_lea.hbm %s0, %s438
          %s440 = sshll.u32 %s433, 4
          %s441 = int_to_ptr.vmem [resolvable:$true] %s440
          %446 = dma.hbm_to_vmem [thread:$0]  %s439, 512, %s441, %s430, 64, 64, 4
        $region48: #{tpu_custom_call.1} parent=43 // pred_fallthru
          _
        // Predicated region
        $region49: #{tpu_custom_call.1} parent=43 // pred_check
          %p447 = pneg %p93
        $region50: #{tpu_custom_call.1} parent=43 // pred_check_branch
          %449 = sbr.rel (%p447) target = $region52
        $region51: #{tpu_custom_call.1} parent=43 // pred_region
          %s450 = sand.u32 %s35, 1
          %s451 = scalar_lea.sflag [#allocation8], %s450
          %s452 = sand.u32 %s83, 1
          %s453 = smul.addr %s452, 64
          %s454 = scalar_lea.vmem [#allocation7], %s453
          %s455 = smul.u32 8, %s42
          %s457 = ssub.s32 1024, 1024
          %458 = vsyncadd %s451, %s457
          %s459 = smul.addr %s455, 128
          %s460 = scalar_lea.hbm %s1, %s459
          %s461 = sshll.u32 %s454, 4
          %s462 = int_to_ptr.vmem [resolvable:$true] %s461
          %467 = dma.hbm_to_vmem [thread:$0]  %s460, 1024, %s462, %s451, 128, 128, 8
        $region52: #{tpu_custom_call.1} parent=43 // pred_fallthru
          _
        // Predicated region
        $region53: #{tpu_custom_call.1} parent=43 // pred_check
          %p468 = pneg %p245
        $region54: #{tpu_custom_call.1} parent=43 // pred_check_branch
          %470 = sbr.rel (%p468) target = $region56
        $region55: #{tpu_custom_call.1} parent=43 // pred_region
          %s471 = sand.u32 %s35, 1
          %s472 = scalar_lea.sflag [#allocation11], %s471
          %s473 = sand.u32 %s235, 1
          %s474 = smul.addr %s473, 128
          %s475 = scalar_lea.vmem [#allocation10], %s474
          %s476 = smul.u32 2, %s43
          %s478 = ssub.s32 2048, 2048
          %479 = vsyncadd %s472, %s478
          %s480 = smul.addr %s476, 64
          %s481 = scalar_lea.hbm %s8, %s480
          %s482 = sshll.u32 %s475, 4
          %s483 = int_to_ptr.vmem [resolvable:$true] %s482
          %488 = dma.hbm_to_vmem [thread:$0]  %s481, 2048, %s483, %s472, 256, 128, 8
        $region56: #{tpu_custom_call.1} parent=43 // pred_fallthru
          _
        // Predicated region
        $region57: #{tpu_custom_call.1} parent=43 // pred_check
          %p489 = pneg %p271
        $region58: #{tpu_custom_call.1} parent=43 // pred_check_branch
          %491 = sbr.rel (%p489) target = $region60
        $region59: #{tpu_custom_call.1} parent=43 // pred_region
          %s492 = smul.u32 2, %s43
          %p493 = scmp.lt.s32.totalorder %s492, 3
          %s494 = scalar_select %p493, %s492, 3
          %s495 = scalar_lea.vmem %s9, %s494
          %s496 = smul.u32 2, %s43
        $region60: #{tpu_custom_call.1} parent=43 // pred_fallthru
          _
        // Predicated region
        $region61: #{tpu_custom_call.1} parent=43 // pred_check
          %p497 = pneg %p297
        $region62: #{tpu_custom_call.1} parent=43 // pred_check_branch
          %499 = sbr.rel (%p497) target = $region64
        $region63: #{tpu_custom_call.1} parent=43 // pred_region
          %s500 = sand.u32 %s35, 1
          %s501 = scalar_lea.sflag [#allocation11], %s500
          %s502 = sand.u32 %s287, 1
          %s503 = smul.addr %s502, 128
          %s504 = scalar_lea.vmem [#allocation12], %s503
          %s505 = smul.u32 32, %s43
          %s507 = ssub.s32 2048, 2048
          %508 = vsyncadd %s501, %s507
          %s509 = smul.addr %s505, 64
          %s510 = scalar_lea.hbm %s10, %s509
          %s511 = sshll.u32 %s504, 4
          %s512 = int_to_ptr.vmem [resolvable:$true] %s511
          %517 = dma.hbm_to_vmem [thread:$0]  %s510, 2048, %s512, %s501, 64, 64, 4
        $region64: #{tpu_custom_call.1} parent=43 // pred_fallthru
          _
      $region44: #{tpu_custom_call.1} parent=5 // pred_fallthru
        _
      %p518 = scmp.le.s32.totalorder 1, %s35
      %p519 = scmp.lt.s32.totalorder %s35, 9
      %p520 = pnand %p518, %p519
      %p521 = pneg %p520
      // Predicated region
      $region65: #{tpu_custom_call.1} parent=5 // pred_check
        _
      $region66: #{tpu_custom_call.1} parent=5 // pred_check_branch
        %523 = sbr.rel (%p520) target = $region68
      $region67: #{tpu_custom_call.1} parent=5 // pred_region
        %s524 = ssub.s32 %s35, 1
        %s525 = sand.u32 %s60, 1
        %s526 = scalar_lea.sflag [#allocation5], %s525
        %s527 = sand.u32 %s60, 1
        %s528 = smul.addr %s527, 32
        %s529 = scalar_lea.vmem [#allocation4], %s528
        // Predicated region
        $region69: #{tpu_custom_call.1} parent=67 // pred_check
          %p530 = pneg %p73
        $region70: #{tpu_custom_call.1} parent=67 // pred_check_branch
          %532 = sbr.rel (%p530) target = $region72
        $region71: #{tpu_custom_call.1} parent=67 // pred_region
          %533 = dma.done %s526, 512
        $region72: #{tpu_custom_call.1} parent=67 // pred_fallthru
          _
        %s534 = sand.u32 %s40, 1
        %s535 = scalar_lea.sflag [#allocation8], %s534
        %s536 = sand.u32 %s86, 1
        %s537 = smul.addr %s536, 64
        %s538 = scalar_lea.vmem [#allocation7], %s537
        // Predicated region
        $region73: #{tpu_custom_call.1} parent=67 // pred_check
          %p539 = pneg %p99
        $region74: #{tpu_custom_call.1} parent=67 // pred_check_branch
          %541 = sbr.rel (%p539) target = $region76
        $region75: #{tpu_custom_call.1} parent=67 // pred_region
          %542 = dma.done %s535, 1024
        $region76: #{tpu_custom_call.1} parent=67 // pred_fallthru
          _
        // Predicated region
        $region77: #{tpu_custom_call.1} parent=67 // pred_check
          %p543 = pneg %p162
        $region78: #{tpu_custom_call.1} parent=67 // pred_check_branch
          %545 = sbr.rel (%p543) target = $region80
        $region79: #{tpu_custom_call.1} parent=67 // pred_region
          %546 = dma.done [#allocation8], 1024
        $region80: #{tpu_custom_call.1} parent=67 // pred_fallthru
          _
        %s547 = sand.u32 %s40, 1
        %s548 = scalar_lea.sflag [#allocation11], %s547
        %s549 = sand.u32 %s238, 1
        %s550 = smul.addr %s549, 128
        %s551 = scalar_lea.vmem [#allocation10], %s550
        // Predicated region
        $region81: #{tpu_custom_call.1} parent=67 // pred_check
          %p552 = pneg %p251
        $region82: #{tpu_custom_call.1} parent=67 // pred_check_branch
          %554 = sbr.rel (%p552) target = $region84
        $region83: #{tpu_custom_call.1} parent=67 // pred_region
          %555 = dma.done %s548, 2048
        $region84: #{tpu_custom_call.1} parent=67 // pred_fallthru
          _
        %s556 = sand.u32 %s40, 1
        %s557 = scalar_lea.sflag [#allocation11], %s556
        %s558 = sand.u32 %s290, 1
        %s559 = smul.addr %s558, 128
        %s560 = scalar_lea.vmem [#allocation12], %s559
        // Predicated region
        $region85: #{tpu_custom_call.1} parent=67 // pred_check
          %p561 = pneg %p303
        $region86: #{tpu_custom_call.1} parent=67 // pred_check_branch
          %563 = sbr.rel (%p561) target = $region88
        $region87: #{tpu_custom_call.1} parent=67 // pred_region
          %564 = dma.done %s557, 2048
        $region88: #{tpu_custom_call.1} parent=67 // pred_fallthru
          _
        %s565 = sand.u32 %s60, 1
        %s566 = scalar_lea.sflag [#allocation5], %s565
        %s567 = sand.u32 %s60, 1
        %s568 = smul.addr %s567, 32
        %s569 = scalar_lea.vmem [#allocation4], %s568
        %p570 = pneg %p73
        %p571 = pneg %p70
        %s572 = sand.u32 %s40, 1
        %s573 = scalar_lea.sflag [#allocation8], %s572
        %s574 = sand.u32 %s86, 1
        %s575 = smul.addr %s574, 64
        %s576 = scalar_lea.vmem [#allocation7], %s575
        %p577 = pneg %p99
        %p578 = pneg %p96
        %p579 = pneg %p120
        %p580 = pneg %p117
        %p581 = pneg %p141
        %p582 = pneg %p138
        %p583 = pneg %p162
        %p584 = pneg %p159
        %p585 = pneg %p183
        %p586 = pneg %p180
        %p587 = pneg %p204
        %p588 = pneg %p201
        %p589 = pneg %p225
        %p590 = pneg %p222
        %s591 = sand.u32 %s40, 1
        %s592 = scalar_lea.sflag [#allocation11], %s591
        %s593 = sand.u32 %s238, 1
        %s594 = smul.addr %s593, 128
        %s595 = scalar_lea.vmem [#allocation10], %s594
        %p596 = pneg %p251
        %p597 = pneg %p248
        %s598 = smul.u32 2, %s45
        %p599 = scmp.lt.s32.totalorder %s598, 3
        %s600 = scalar_select %p599, %s598, 3
        %s601 = scalar_lea.vmem %s9, %s600
        %p602 = pneg %p277
        %p603 = pneg %p274
        %s604 = sand.u32 %s40, 1
        %s605 = scalar_lea.sflag [#allocation11], %s604
        %s606 = sand.u32 %s290, 1
        %s607 = smul.addr %s606, 128
        %s608 = scalar_lea.vmem [#allocation12], %s607
        %p609 = pneg %p303
        %p610 = pneg %p300
        %p611 = pneg %p324
        %p612 = pneg %p321
        %p613 = pneg %p350
        %p614 = pneg %p347
        %s615 = sand.u32 %s337, 1
        %s616 = scalar_lea.sflag [#allocation6], %s615
        %s617 = sand.u32 %s337, 1
        %s618 = smul.addr %s617, 32
        %s619 = scalar_lea.vmem [#allocation13], %s618
        %p620 = pneg %p376
        %p621 = pneg %p373
        %s622 = sand.u32 %s363, 1
        %s623 = scalar_lea.sflag [#allocation15], %s622
        %s624 = sand.u32 %s363, 1
        %s625 = smul.addr %s624, 64
        %s626 = scalar_lea.vmem [#allocation14], %s625
        %s627 = smul.u32 8, %s44
        %s628 = smul.u32 8, %s44
        %s629 = smul.u32 2, %s45
        %s630 = smul.u32 2, %s45
        %p631 = scmp.lt.s32.totalorder %s630, 3
        %s632 = scalar_select %p631, %s630, 3
        %s633 = scalar_lea.vmem %s9, %s632
        %s634 = smul.u32 2, %s45
        %s635 = smul.u32 32, %s45
        %s636 = smul.u32 8, %s44
        %s637 = smul.u32 8, %s44
        %p639 = scmp.eq.s32.totalorder %s45, 0
        // Predicated region
        $region89: #{tpu_custom_call.1} parent=67 // pred_check
          %p640 = pneg %p639
        $region90: #{tpu_custom_call.1} parent=67 // pred_check_branch
          %642 = sbr.rel (%p640) target = $region92
        $region91: #{tpu_custom_call.1} parent=67 // pred_region
          %v643 = vld [vmem:[%s529] sm:$0xf]
          %v644 = vld [vmem:[%s529 + $0x4] sm:$0xf]
          %v645 = vld [vmem:[%s529 + $0x8] sm:$0xf]
          %v646 = vld [vmem:[%s529 + $0xc] sm:$0xf]
          %v647 = vld [vmem:[%s529 + $0x10] sm:$0xf]
          %v648 = vld [vmem:[%s529 + $0x14] sm:$0xf]
          %v649 = vld [vmem:[%s529 + $0x18] sm:$0xf]
          %v650 = vld [vmem:[%s529 + $0x1c] sm:$0xf]
          %v651 = vunpack.c.l.bf16 %v643
          %v652 = vunpack.c.l.bf16 %v644
          %v653 = vunpack.c.l.bf16 %v645
          %v654 = vunpack.c.l.bf16 %v646
          %v655 = vunpack.c.l.bf16 %v647
          %v656 = vunpack.c.l.bf16 %v648
          %v657 = vunpack.c.l.bf16 %v649
          %v658 = vunpack.c.l.bf16 %v650
          %v659 = vld [vmem:[%s538] sm:$0xff]
          %v660 = vld [vmem:[%s538 + $0x8] sm:$0xff]
          %v661 = vld [vmem:[%s538 + $0x10] sm:$0xff]
          %v662 = vld [vmem:[%s538 + $0x18] sm:$0xff]
          %v663 = vld [vmem:[%s538 + $0x20] sm:$0xff]
          %v664 = vld [vmem:[%s538 + $0x28] sm:$0xff]
          %v665 = vld [vmem:[%s538 + $0x30] sm:$0xff]
          %v666 = vld [vmem:[%s538 + $0x38] sm:$0xff]
          %v667 = vadd.f32 %v651, %v659
          %v668 = vadd.f32 %v652, %v660
          %v669 = vadd.f32 %v653, %v661
          %v670 = vadd.f32 %v654, %v662
          %v671 = vadd.f32 %v655, %v663
          %v672 = vadd.f32 %v656, %v664
          %v673 = vadd.f32 %v657, %v665
          %v674 = vadd.f32 %v658, %v666
          %v675 = vld [vmem:[%s2] sm:$0x1]
          %v676 = vld [vmem:[%s3] sm:$0x1]
          %677 = vadd.xlane.f32.xlu0 %v667
          %v678 = vpop.xlane.xlu0 %677
          %679 = vadd.xlane.f32.xlu0 %v668
          %v680 = vpop.xlane.xlu0 %679
          %681 = vadd.xlane.f32.xlu0 %v669
          %v682 = vpop.xlane.xlu0 %681
          %683 = vadd.xlane.f32.xlu0 %v670
          %v684 = vpop.xlane.xlu0 %683
          %685 = vadd.xlane.f32.xlu0 %v671
          %v686 = vpop.xlane.xlu0 %685
          %687 = vadd.xlane.f32.xlu0 %v672
          %v688 = vpop.xlane.xlu0 %687
          %689 = vadd.xlane.f32.xlu0 %v673
          %v690 = vpop.xlane.xlu0 %689
          %691 = vadd.xlane.f32.xlu0 %v674
          %v692 = vpop.xlane.xlu0 %691
          %v693 = vrcp.pop 128.0
          %v694 = vmul.f32 %v678, %v693
          %v695 = vmul.f32 %v680, %v693
          %v696 = vmul.f32 %v682, %v693
          %v697 = vmul.f32 %v684, %v693
          %v698 = vmul.f32 %v686, %v693
          %v699 = vmul.f32 %v688, %v693
          %v700 = vmul.f32 %v690, %v693
          %v701 = vmul.f32 %v692, %v693
          %v702 = vsub.f32 %v667, %v694
          %v703 = vsub.f32 %v668, %v695
          %v704 = vsub.f32 %v669, %v696
          %v705 = vsub.f32 %v670, %v697
          %v706 = vsub.f32 %v671, %v698
          %v707 = vsub.f32 %v672, %v699
          %v708 = vsub.f32 %v673, %v700
          %v709 = vsub.f32 %v674, %v701
          %v710 = vmul.f32 %v702, %v702
          %v711 = vmul.f32 %v703, %v703
          %v712 = vmul.f32 %v704, %v704
          %v713 = vmul.f32 %v705, %v705
          %v714 = vmul.f32 %v706, %v706
          %v715 = vmul.f32 %v707, %v707
          %v716 = vmul.f32 %v708, %v708
          %v717 = vmul.f32 %v709, %v709
          %718 = vadd.xlane.f32.xlu0 %v710
          %v719 = vpop.xlane.xlu0 %718
          %720 = vadd.xlane.f32.xlu0 %v711
          %v721 = vpop.xlane.xlu0 %720
          %722 = vadd.xlane.f32.xlu0 %v712
          %v723 = vpop.xlane.xlu0 %722
          %724 = vadd.xlane.f32.xlu0 %v713
          %v725 = vpop.xlane.xlu0 %724
          %726 = vadd.xlane.f32.xlu0 %v714
          %v727 = vpop.xlane.xlu0 %726
          %728 = vadd.xlane.f32.xlu0 %v715
          %v729 = vpop.xlane.xlu0 %728
          %730 = vadd.xlane.f32.xlu0 %v716
          %v731 = vpop.xlane.xlu0 %730
          %732 = vadd.xlane.f32.xlu0 %v717
          %v733 = vpop.xlane.xlu0 %732
          %v734 = vmul.f32 %v719, %v693
          %v735 = vmul.f32 %v721, %v693
          %v736 = vmul.f32 %v723, %v693
          %v737 = vmul.f32 %v725, %v693
          %v738 = vmul.f32 %v727, %v693
          %v739 = vmul.f32 %v729, %v693
          %v740 = vmul.f32 %v731, %v693
          %v741 = vmul.f32 %v733, %v693
          %v742 = vadd.f32 %v734, 1e-05
          %v743 = vadd.f32 %v735, 1e-05
          %v744 = vadd.f32 %v736, 1e-05
          %v745 = vadd.f32 %v737, 1e-05
          %v746 = vadd.f32 %v738, 1e-05
          %v747 = vadd.f32 %v739, 1e-05
          %v748 = vadd.f32 %v740, 1e-05
          %v749 = vadd.f32 %v741, 1e-05
          %v750 = vrsqrt.pop %v742
          %v751 = vrsqrt.pop %v743
          %v752 = vrsqrt.pop %v744
          %v753 = vrsqrt.pop %v745
          %v754 = vrsqrt.pop %v746
          %v755 = vrsqrt.pop %v747
          %v756 = vrsqrt.pop %v748
          %v757 = vrsqrt.pop %v749
          %v758 = vmul.f32 %v702, %v750
          %v759 = vmul.f32 %v703, %v751
          %v760 = vmul.f32 %v704, %v752
          %v761 = vmul.f32 %v705, %v753
          %v762 = vmul.f32 %v706, %v754
          %v763 = vmul.f32 %v707, %v755
          %v764 = vmul.f32 %v708, %v756
          %v765 = vmul.f32 %v709, %v757
          %v767 = vlaneseq
          %v768 = vshrl.u32 %v767, 7
          %v769 = vsub.s32 0, %v768
          %v770 = vrot.slane %v675, %v769
          %v772 = vmul.f32 %v758, %v770
          %v773 = vmul.f32 %v759, %v770
          %v774 = vmul.f32 %v760, %v770
          %v775 = vmul.f32 %v761, %v770
          %v776 = vmul.f32 %v762, %v770
          %v777 = vmul.f32 %v763, %v770
          %v778 = vmul.f32 %v764, %v770
          %v779 = vmul.f32 %v765, %v770
          %v781 = vlaneseq
          %v782 = vshrl.u32 %v781, 7
          %v783 = vsub.s32 0, %v782
          %v784 = vrot.slane %v676, %v783
          %v786 = vadd.f32 %v772, %v784
          %v787 = vadd.f32 %v773, %v784
          %v788 = vadd.f32 %v774, %v784
          %v789 = vadd.f32 %v775, %v784
          %v790 = vadd.f32 %v776, %v784
          %v791 = vadd.f32 %v777, %v784
          %v792 = vadd.f32 %v778, %v784
          %v793 = vadd.f32 %v779, %v784
          %v794 = vpack.c.bf16 %v787, %v786
          %v795 = vpack.c.bf16 %v789, %v788
          %v796 = vpack.c.bf16 %v791, %v790
          %v797 = vpack.c.bf16 %v793, %v792
          %v798 = vld [vmem:[#allocation9] sm:$0xf]
          %v799 = vld [vmem:[#allocation9 + $0x4] sm:$0xf]
          %v800 = vld [vmem:[#allocation9 + $0x8] sm:$0xf]
          %v801 = vld [vmem:[#allocation9 + $0xc] sm:$0xf]
          %v802 = vld [vmem:[#allocation9 + $0x10] sm:$0xf]
          %v803 = vld [vmem:[#allocation9 + $0x14] sm:$0xf]
          %v804 = vld [vmem:[#allocation9 + $0x18] sm:$0xf]
          %v805 = vld [vmem:[#allocation9 + $0x1c] sm:$0xf]
          %v806 = vld [vmem:[#allocation9 + $0x20] sm:$0xf]
          %v807 = vld [vmem:[#allocation9 + $0x24] sm:$0xf]
          %v808 = vld [vmem:[#allocation9 + $0x28] sm:$0xf]
          %v809 = vld [vmem:[#allocation9 + $0x2c] sm:$0xf]
          %v810 = vld [vmem:[#allocation9 + $0x30] sm:$0xf]
          %v811 = vld [vmem:[#allocation9 + $0x34] sm:$0xf]
          %v812 = vld [vmem:[#allocation9 + $0x38] sm:$0xf]
          %v813 = vld [vmem:[#allocation9 + $0x3c] sm:$0xf]
          %v814 = vld [vmem:[%s5] sm:$0x1]
          %v816 = vlaneseq
          %v817 = vshrl.u32 %v816, 7
          %v818 = vsub.s32 0, %v817
          %v819 = vrot.slane %v814, %v818
          %v837 = vunpack.c.l.b16 %v798
          %v838 = vunpack.c.l.b16 %v799
          %v839 = vunpack.c.l.b16 %v800
          %v840 = vunpack.c.l.b16 %v801
          %v841 = vunpack.c.l.b16 %v802
          %v842 = vunpack.c.l.b16 %v803
          %v843 = vunpack.c.l.b16 %v804
          %v844 = vunpack.c.l.b16 %v805
          %v845 = vunpack.c.l.b16 %v806
          %v846 = vunpack.c.l.b16 %v807
          %v847 = vunpack.c.l.b16 %v808
          %v848 = vunpack.c.l.b16 %v809
          %v849 = vunpack.c.l.b16 %v810
          %v850 = vunpack.c.l.b16 %v811
          %v851 = vunpack.c.l.b16 %v812
          %v852 = vunpack.c.l.b16 %v813
          %v853 = vpack.c.b16 %v838, %v837
          %v854 = vpack.c.b16 %v840, %v839
          %v855 = vpack.c.b16 %v842, %v841
          %v856 = vpack.c.b16 %v844, %v843
          %v857 = vpack.c.b16 %v846, %v845
          %v858 = vpack.c.b16 %v848, %v847
          %v859 = vpack.c.b16 %v850, %v849
          %v860 = vpack.c.b16 %v852, %v851
          %869 = vmatprep.subr.bf16.mxu0 0
          %870 = vmatpush1.bf16.msra.mxu0 %v860
          %871 = vmatprep.subr.bf16.mxu0 0
          %872 = vmatpush1.bf16.msra.mxu0 %v859
          %873 = vmatprep.subr.bf16.mxu0 0
          %874 = vmatpush1.bf16.msra.mxu0 %v858
          %875 = vmatprep.subr.bf16.mxu0 0
          %876 = vmatpush1.bf16.msra.mxu0 %v857
          %877 = vmatprep.subr.bf16.mxu0 0
          %878 = vmatpush1.bf16.msra.mxu0 %v856
          %879 = vmatprep.subr.bf16.mxu0 0
          %880 = vmatpush1.bf16.msra.mxu0 %v855
          %881 = vmatprep.subr.bf16.mxu0 0
          %882 = vmatpush1.bf16.msra.mxu0 %v854
          %883 = vmatprep.subr.bf16.mxu0 0
          %884 = vmatpush1.bf16.msra.mxu0 %v853
          %885 = vmatprep.subr.bf16.mxu0 0
          %886 = vmatpush2.bf16.msra.mxu0 0
          %887 = vmatprep.subr.bf16.mxu0 0
          %888 = vmatpush2.bf16.msra.mxu0 0
          %889 = vmatprep.subr.bf16.mxu0 0
          %890 = vmatpush2.bf16.msra.mxu0 0
          %891 = vmatprep.subr.bf16.mxu0 0
          %892 = vmatpush2.bf16.msra.mxu0 0
          %893 = vmatprep.subr.bf16.mxu0 0
          %894 = vmatpush2.bf16.msra.mxu0 0
          %895 = vmatprep.subr.bf16.mxu0 0
          %896 = vmatpush2.bf16.msra.mxu0 0
          %897 = vmatprep.subr.bf16.mxu0 0
          %898 = vmatpush2.bf16.msra.mxu0 0
          %899 = vmatprep.subr.bf16.mxu0 0
          %900 = vmatpush2.bf16.msra.mxu0 0
          %901 = vmatprep.mubr.bf16.mxu0 0
          %902 = vmatmul.mubr.bf16.gmra.mxu0 %v794
          %v903 = vpop.f32.mrf.mxu0
          %v904 = vadd.f32 %v819, %v903
          %v905 = vpop.f32.mrf.mxu0
          %v906 = vpop.f32.mrf.mxu0
          %v907 = vadd.f32 %v819, %v906
          %v908 = vpop.f32.mrf.mxu0
          %909 = vmatprep.mubr.bf16.mxu0 0
          %910 = vmatmul.mubr.bf16.gmra.mxu0 %v795
          %v911 = vpop.f32.mrf.mxu0
          %v912 = vadd.f32 %v819, %v911
          %v913 = vpop.f32.mrf.mxu0
          %v914 = vpop.f32.mrf.mxu0
          %v915 = vadd.f32 %v819, %v914
          %v916 = vpop.f32.mrf.mxu0
          %917 = vmatprep.mubr.bf16.mxu0 0
          %918 = vmatmul.mubr.bf16.gmra.mxu0 %v796
          %v919 = vpop.f32.mrf.mxu0
          %v920 = vadd.f32 %v819, %v919
          %v921 = vpop.f32.mrf.mxu0
          %v922 = vpop.f32.mrf.mxu0
          %v923 = vadd.f32 %v819, %v922
          %v924 = vpop.f32.mrf.mxu0
          %925 = vmatprep.mubr.bf16.mxu0 0
          %926 = vmatmul.mubr.bf16.gmra.mxu0 %v797
          %v927 = vpop.f32.mrf.mxu0
          %v928 = vadd.f32 %v819, %v927
          %v929 = vpop.f32.mrf.mxu0
          %v930 = vpop.f32.mrf.mxu0
          %v931 = vadd.f32 %v819, %v930
          %v932 = vpop.f32.mrf.mxu0
          %933 = vdwg.mxu0
          %v934 = vadd.f32 %v904, %v667
          %v935 = vadd.f32 %v907, %v668
          %v936 = vadd.f32 %v912, %v669
          %v937 = vadd.f32 %v915, %v670
          %v938 = vadd.f32 %v920, %v671
          %v939 = vadd.f32 %v923, %v672
          %v940 = vadd.f32 %v928, %v673
          %v941 = vadd.f32 %v931, %v674
          %942 = vst [vmem:[%s626] sm:$0xff] %v934
          %943 = vst [vmem:[%s626 + $0x8] sm:$0xff] %v935
          %944 = vst [vmem:[%s626 + $0x10] sm:$0xff] %v936
          %945 = vst [vmem:[%s626 + $0x18] sm:$0xff] %v937
          %946 = vst [vmem:[%s626 + $0x20] sm:$0xff] %v938
          %947 = vst [vmem:[%s626 + $0x28] sm:$0xff] %v939
          %948 = vst [vmem:[%s626 + $0x30] sm:$0xff] %v940
          %949 = vst [vmem:[%s626 + $0x38] sm:$0xff] %v941
          %v950 = vld [vmem:[%s6] sm:$0x1]
          %v951 = vld [vmem:[%s7] sm:$0x1]
          %952 = vadd.xlane.f32.xlu0 %v934
          %v953 = vpop.xlane.xlu0 %952
          %954 = vadd.xlane.f32.xlu0 %v935
          %v955 = vpop.xlane.xlu0 %954
          %956 = vadd.xlane.f32.xlu0 %v936
          %v957 = vpop.xlane.xlu0 %956
          %958 = vadd.xlane.f32.xlu0 %v937
          %v959 = vpop.xlane.xlu0 %958
          %960 = vadd.xlane.f32.xlu0 %v938
          %v961 = vpop.xlane.xlu0 %960
          %962 = vadd.xlane.f32.xlu0 %v939
          %v963 = vpop.xlane.xlu0 %962
          %964 = vadd.xlane.f32.xlu0 %v940
          %v965 = vpop.xlane.xlu0 %964
          %966 = vadd.xlane.f32.xlu0 %v941
          %v967 = vpop.xlane.xlu0 %966
          %v968 = vmul.f32 %v953, %v693
          %v969 = vmul.f32 %v955, %v693
          %v970 = vmul.f32 %v957, %v693
          %v971 = vmul.f32 %v959, %v693
          %v972 = vmul.f32 %v961, %v693
          %v973 = vmul.f32 %v963, %v693
          %v974 = vmul.f32 %v965, %v693
          %v975 = vmul.f32 %v967, %v693
          %v976 = vsub.f32 %v934, %v968
          %v977 = vsub.f32 %v935, %v969
          %v978 = vsub.f32 %v936, %v970
          %v979 = vsub.f32 %v937, %v971
          %v980 = vsub.f32 %v938, %v972
          %v981 = vsub.f32 %v939, %v973
          %v982 = vsub.f32 %v940, %v974
          %v983 = vsub.f32 %v941, %v975
          %v984 = vmul.f32 %v976, %v976
          %v985 = vmul.f32 %v977, %v977
          %v986 = vmul.f32 %v978, %v978
          %v987 = vmul.f32 %v979, %v979
          %v988 = vmul.f32 %v980, %v980
          %v989 = vmul.f32 %v981, %v981
          %v990 = vmul.f32 %v982, %v982
          %v991 = vmul.f32 %v983, %v983
          %992 = vadd.xlane.f32.xlu0 %v984
          %v993 = vpop.xlane.xlu0 %992
          %994 = vadd.xlane.f32.xlu0 %v985
          %v995 = vpop.xlane.xlu0 %994
          %996 = vadd.xlane.f32.xlu0 %v986
          %v997 = vpop.xlane.xlu0 %996
          %998 = vadd.xlane.f32.xlu0 %v987
          %v999 = vpop.xlane.xlu0 %998
          %1000 = vadd.xlane.f32.xlu0 %v988
          %v1001 = vpop.xlane.xlu0 %1000
          %1002 = vadd.xlane.f32.xlu0 %v989
          %v1003 = vpop.xlane.xlu0 %1002
          %1004 = vadd.xlane.f32.xlu0 %v990
          %v1005 = vpop.xlane.xlu0 %1004
          %1006 = vadd.xlane.f32.xlu0 %v991
          %v1007 = vpop.xlane.xlu0 %1006
          %v1008 = vmul.f32 %v993, %v693
          %v1009 = vmul.f32 %v995, %v693
          %v1010 = vmul.f32 %v997, %v693
          %v1011 = vmul.f32 %v999, %v693
          %v1012 = vmul.f32 %v1001, %v693
          %v1013 = vmul.f32 %v1003, %v693
          %v1014 = vmul.f32 %v1005, %v693
          %v1015 = vmul.f32 %v1007, %v693
          %v1016 = vadd.f32 %v1008, 1e-05
          %v1017 = vadd.f32 %v1009, 1e-05
          %v1018 = vadd.f32 %v1010, 1e-05
          %v1019 = vadd.f32 %v1011, 1e-05
          %v1020 = vadd.f32 %v1012, 1e-05
          %v1021 = vadd.f32 %v1013, 1e-05
          %v1022 = vadd.f32 %v1014, 1e-05
          %v1023 = vadd.f32 %v1015, 1e-05
          %v1024 = vrsqrt.pop %v1016
          %v1025 = vrsqrt.pop %v1017
          %v1026 = vrsqrt.pop %v1018
          %v1027 = vrsqrt.pop %v1019
          %v1028 = vrsqrt.pop %v1020
          %v1029 = vrsqrt.pop %v1021
          %v1030 = vrsqrt.pop %v1022
          %v1031 = vrsqrt.pop %v1023
          %v1032 = vmul.f32 %v976, %v1024
          %v1033 = vmul.f32 %v977, %v1025
          %v1034 = vmul.f32 %v978, %v1026
          %v1035 = vmul.f32 %v979, %v1027
          %v1036 = vmul.f32 %v980, %v1028
          %v1037 = vmul.f32 %v981, %v1029
          %v1038 = vmul.f32 %v982, %v1030
          %v1039 = vmul.f32 %v983, %v1031
          %v1041 = vlaneseq
          %v1042 = vshrl.u32 %v1041, 7
          %v1043 = vsub.s32 0, %v1042
          %v1044 = vrot.slane %v950, %v1043
          %v1046 = vmul.f32 %v1032, %v1044
          %v1047 = vmul.f32 %v1033, %v1044
          %v1048 = vmul.f32 %v1034, %v1044
          %v1049 = vmul.f32 %v1035, %v1044
          %v1050 = vmul.f32 %v1036, %v1044
          %v1051 = vmul.f32 %v1037, %v1044
          %v1052 = vmul.f32 %v1038, %v1044
          %v1053 = vmul.f32 %v1039, %v1044
          %v1055 = vlaneseq
          %v1056 = vshrl.u32 %v1055, 7
          %v1057 = vsub.s32 0, %v1056
          %v1058 = vrot.slane %v951, %v1057
          %v1060 = vadd.f32 %v1046, %v1058
          %v1061 = vadd.f32 %v1047, %v1058
          %v1062 = vadd.f32 %v1048, %v1058
          %v1063 = vadd.f32 %v1049, %v1058
          %v1064 = vadd.f32 %v1050, %v1058
          %v1065 = vadd.f32 %v1051, %v1058
          %v1066 = vadd.f32 %v1052, %v1058
          %v1067 = vadd.f32 %v1053, %v1058
          %v1068 = vpack.c.bf16 %v1061, %v1060
          %v1069 = vpack.c.bf16 %v1063, %v1062
          %v1070 = vpack.c.bf16 %v1065, %v1064
          %v1071 = vpack.c.bf16 %v1067, %v1066
          %v1076 = vunpack.c.l.b16 %v1068
          %v1077 = vunpack.c.h.b16 %v1068
          %v1078 = vunpack.c.l.b16 %v1069
          %v1079 = vunpack.c.h.b16 %v1069
          %v1080 = vunpack.c.l.b16 %v1070
          %v1081 = vunpack.c.h.b16 %v1070
          %v1082 = vunpack.c.l.b16 %v1071
          %v1083 = vunpack.c.h.b16 %v1071
          %v1084 = vpack.c.b16 %v1076, %v1076
          %v1085 = vpack.c.b16 %v1077, %v1077
          %v1086 = vpack.c.b16 %v1078, %v1078
          %v1087 = vpack.c.b16 %v1079, %v1079
          %v1088 = vpack.c.b16 %v1080, %v1080
          %v1089 = vpack.c.b16 %v1081, %v1081
          %v1090 = vpack.c.b16 %v1082, %v1082
          %v1091 = vpack.c.b16 %v1083, %v1083
          %1100 = vst [vmem:[#allocation2] sm:$0xf] %v1084
          %1101 = vst [vmem:[#allocation2 + $0x4] sm:$0xf] %v1085
          %1102 = vst [vmem:[#allocation2 + $0x8] sm:$0xf] %v1086
          %1103 = vst [vmem:[#allocation2 + $0xc] sm:$0xf] %v1087
          %1104 = vst [vmem:[#allocation2 + $0x10] sm:$0xf] %v1088
          %1105 = vst [vmem:[#allocation2 + $0x14] sm:$0xf] %v1089
          %1106 = vst [vmem:[#allocation2 + $0x18] sm:$0xf] %v1090
          %1107 = vst [vmem:[#allocation2 + $0x1c] sm:$0xf] %v1091
        $region92: #{tpu_custom_call.1} parent=67 // pred_fallthru
          _
        %v1108 = vld [vmem:[#allocation2] sm:$0xf]
        %v1109 = vld [vmem:[#allocation2 + $0x4] sm:$0xf]
        %v1110 = vld [vmem:[#allocation2 + $0x8] sm:$0xf]
        %v1111 = vld [vmem:[#allocation2 + $0xc] sm:$0xf]
        %v1112 = vld [vmem:[#allocation2 + $0x10] sm:$0xf]
        %v1113 = vld [vmem:[#allocation2 + $0x14] sm:$0xf]
        %v1114 = vld [vmem:[#allocation2 + $0x18] sm:$0xf]
        %v1115 = vld [vmem:[#allocation2 + $0x1c] sm:$0xf]
        %v1116 = vld [vmem:[%s551] sm:$0xff]
        %v1117 = vld [vmem:[%s551 + $0x8] sm:$0xff]
        %v1118 = vld [vmem:[%s551 + $0x10] sm:$0xff]
        %v1119 = vld [vmem:[%s551 + $0x18] sm:$0xff]
        %v1120 = vld [vmem:[%s551 + $0x20] sm:$0xff]
        %v1121 = vld [vmem:[%s551 + $0x28] sm:$0xff]
        %v1122 = vld [vmem:[%s551 + $0x30] sm:$0xff]
        %v1123 = vld [vmem:[%s551 + $0x38] sm:$0xff]
        %v1124 = vld [vmem:[%s551 + $0x40] sm:$0xff]
        %v1125 = vld [vmem:[%s551 + $0x48] sm:$0xff]
        %v1126 = vld [vmem:[%s551 + $0x50] sm:$0xff]
        %v1127 = vld [vmem:[%s551 + $0x58] sm:$0xff]
        %v1128 = vld [vmem:[%s551 + $0x60] sm:$0xff]
        %v1129 = vld [vmem:[%s551 + $0x68] sm:$0xff]
        %v1130 = vld [vmem:[%s551 + $0x70] sm:$0xff]
        %v1131 = vld [vmem:[%s551 + $0x78] sm:$0xff]
        %v1132 = vld [vmem:[%s633] sm:$0x3]
        %v1134 = vlaneseq
        %v1135 = vshrl.u32 %v1134, 7
        %v1136 = vsub.s32 0, %v1135
        %v1137 = vrot.slane %v1132, %v1136
        %v1138 = vlaneseq
        %v1139 = vshrl.u32 %v1138, 7
        %v1140 = vsub.s32 1, %v1139
        %v1141 = vrot.slane %v1132, %v1140
        %v1152 = vunpack.c.l.b16 %v1108
        %v1153 = vunpack.c.l.b16 %v1109
        %v1154 = vunpack.c.l.b16 %v1110
        %v1155 = vunpack.c.l.b16 %v1111
        %v1156 = vunpack.c.l.b16 %v1112
        %v1157 = vunpack.c.l.b16 %v1113
        %v1158 = vunpack.c.l.b16 %v1114
        %v1159 = vunpack.c.l.b16 %v1115
        %v1160 = vpack.c.b16 %v1153, %v1152
        %v1161 = vpack.c.b16 %v1155, %v1154
        %v1162 = vpack.c.b16 %v1157, %v1156
        %v1163 = vpack.c.b16 %v1159, %v1158
        %v1184 = vunpack.c.l.b16 %v1116
        %v1185 = vunpack.c.h.b16 %v1116
        %v1186 = vunpack.c.l.b16 %v1117
        %v1187 = vunpack.c.h.b16 %v1117
        %v1188 = vunpack.c.l.b16 %v1118
        %v1189 = vunpack.c.h.b16 %v1118
        %v1190 = vunpack.c.l.b16 %v1119
        %v1191 = vunpack.c.h.b16 %v1119
        %v1192 = vunpack.c.l.b16 %v1120
        %v1193 = vunpack.c.h.b16 %v1120
        %v1194 = vunpack.c.l.b16 %v1121
        %v1195 = vunpack.c.h.b16 %v1121
        %v1196 = vunpack.c.l.b16 %v1122
        %v1197 = vunpack.c.h.b16 %v1122
        %v1198 = vunpack.c.l.b16 %v1123
        %v1199 = vunpack.c.h.b16 %v1123
        %v1200 = vunpack.c.l.b16 %v1124
        %v1201 = vunpack.c.h.b16 %v1124
        %v1202 = vunpack.c.l.b16 %v1125
        %v1203 = vunpack.c.h.b16 %v1125
        %v1204 = vunpack.c.l.b16 %v1126
        %v1205 = vunpack.c.h.b16 %v1126
        %v1206 = vunpack.c.l.b16 %v1127
        %v1207 = vunpack.c.h.b16 %v1127
        %v1208 = vunpack.c.l.b16 %v1128
        %v1209 = vunpack.c.h.b16 %v1128
        %v1210 = vunpack.c.l.b16 %v1129
        %v1211 = vunpack.c.h.b16 %v1129
        %v1212 = vunpack.c.l.b16 %v1130
        %v1213 = vunpack.c.h.b16 %v1130
        %v1214 = vunpack.c.l.b16 %v1131
        %v1215 = vunpack.c.h.b16 %v1131
        %v1216 = vpack.c.b16 %v1186, %v1184
        %v1217 = vpack.c.b16 %v1187, %v1185
        %v1218 = vpack.c.b16 %v1190, %v1188
        %v1219 = vpack.c.b16 %v1191, %v1189
        %v1220 = vpack.c.b16 %v1194, %v1192
        %v1221 = vpack.c.b16 %v1195, %v1193
        %v1222 = vpack.c.b16 %v1198, %v1196
        %v1223 = vpack.c.b16 %v1199, %v1197
        %v1224 = vpack.c.b16 %v1202, %v1200
        %v1225 = vpack.c.b16 %v1203, %v1201
        %v1226 = vpack.c.b16 %v1206, %v1204
        %v1227 = vpack.c.b16 %v1207, %v1205
        %v1228 = vpack.c.b16 %v1210, %v1208
        %v1229 = vpack.c.b16 %v1211, %v1209
        %v1230 = vpack.c.b16 %v1214, %v1212
        %v1231 = vpack.c.b16 %v1215, %v1213
        %1248 = vmatprep.subr.bf16.mxu0 %v1231
        %1249 = vmatpush1.bf16.msra.mxu0 %v1230
        %1250 = vmatprep.subr.bf16.mxu0 %v1229
        %1251 = vmatpush1.bf16.msra.mxu0 %v1228
        %1252 = vmatprep.subr.bf16.mxu0 %v1227
        %1253 = vmatpush1.bf16.msra.mxu0 %v1226
        %1254 = vmatprep.subr.bf16.mxu0 %v1225
        %1255 = vmatpush1.bf16.msra.mxu0 %v1224
        %1256 = vmatprep.subr.bf16.mxu0 %v1223
        %1257 = vmatpush1.bf16.msra.mxu0 %v1222
        %1258 = vmatprep.subr.bf16.mxu0 %v1221
        %1259 = vmatpush1.bf16.msra.mxu0 %v1220
        %1260 = vmatprep.subr.bf16.mxu0 %v1219
        %1261 = vmatpush1.bf16.msra.mxu0 %v1218
        %1262 = vmatprep.subr.bf16.mxu0 %v1217
        %1263 = vmatpush1.bf16.msra.mxu0 %v1216
        %1264 = vmatprep.subr.bf16.mxu0 0
        %1265 = vmatpush2.bf16.msra.mxu0 0
        %1266 = vmatprep.subr.bf16.mxu0 0
        %1267 = vmatpush2.bf16.msra.mxu0 0
        %1268 = vmatprep.subr.bf16.mxu0 0
        %1269 = vmatpush2.bf16.msra.mxu0 0
        %1270 = vmatprep.subr.bf16.mxu0 0
        %1271 = vmatpush2.bf16.msra.mxu0 0
        %1272 = vmatprep.subr.bf16.mxu0 0
        %1273 = vmatpush2.bf16.msra.mxu0 0
        %1274 = vmatprep.subr.bf16.mxu0 0
        %1275 = vmatpush2.bf16.msra.mxu0 0
        %1276 = vmatprep.subr.bf16.mxu0 0
        %1277 = vmatpush2.bf16.msra.mxu0 0
        %1278 = vmatprep.subr.bf16.mxu0 0
        %1279 = vmatpush2.bf16.msra.mxu0 0
        %1280 = vmatprep.mubr.bf16.mxu0 0
        %1281 = vmatmul.mubr.bf16.gmra.mxu0 %v1160
        %v1282 = vpop.f32.mrf.mxu0
        %v1283 = vadd.f32 %v1137, %v1282
        %v1284 = vpop.f32.mrf.mxu0
        %v1285 = vadd.f32 %v1141, %v1284
        %v1286 = vpop.f32.mrf.mxu0
        %v1287 = vadd.f32 %v1137, %v1286
        %v1288 = vpop.f32.mrf.mxu0
        %v1289 = vadd.f32 %v1141, %v1288
        %1290 = vmatprep.mubr.bf16.mxu0 0
        %1291 = vmatmul.mubr.bf16.gmra.mxu0 %v1161
        %v1292 = vpop.f32.mrf.mxu0
        %v1293 = vadd.f32 %v1137, %v1292
        %v1294 = vpop.f32.mrf.mxu0
        %v1295 = vadd.f32 %v1141, %v1294
        %v1296 = vpop.f32.mrf.mxu0
        %v1297 = vadd.f32 %v1137, %v1296
        %v1298 = vpop.f32.mrf.mxu0
        %v1299 = vadd.f32 %v1141, %v1298
        %1300 = vmatprep.mubr.bf16.mxu0 0
        %1301 = vmatmul.mubr.bf16.gmra.mxu0 %v1162
        %v1302 = vpop.f32.mrf.mxu0
        %v1303 = vadd.f32 %v1137, %v1302
        %v1304 = vpop.f32.mrf.mxu0
        %v1305 = vadd.f32 %v1141, %v1304
        %v1306 = vpop.f32.mrf.mxu0
        %v1307 = vadd.f32 %v1137, %v1306
        %v1308 = vpop.f32.mrf.mxu0
        %v1309 = vadd.f32 %v1141, %v1308
        %1310 = vmatprep.mubr.bf16.mxu0 0
        %1311 = vmatmul.mubr.bf16.gmra.mxu0 %v1163
        %v1312 = vpop.f32.mrf.mxu0
        %v1313 = vadd.f32 %v1137, %v1312
        %v1314 = vpop.f32.mrf.mxu0
        %v1315 = vadd.f32 %v1141, %v1314
        %v1316 = vpop.f32.mrf.mxu0
        %v1317 = vadd.f32 %v1137, %v1316
        %v1318 = vpop.f32.mrf.mxu0
        %v1319 = vadd.f32 %v1141, %v1318
        %1320 = vdwg.mxu0
        %v1321 = vmul.f32 %v1283, %v1283
        %v1322 = vmul.f32 %v1285, %v1285
        %v1323 = vmul.f32 %v1287, %v1287
        %v1324 = vmul.f32 %v1289, %v1289
        %v1325 = vmul.f32 %v1293, %v1293
        %v1326 = vmul.f32 %v1295, %v1295
        %v1327 = vmul.f32 %v1297, %v1297
        %v1328 = vmul.f32 %v1299, %v1299
        %v1329 = vmul.f32 %v1303, %v1303
        %v1330 = vmul.f32 %v1305, %v1305
        %v1331 = vmul.f32 %v1307, %v1307
        %v1332 = vmul.f32 %v1309, %v1309
        %v1333 = vmul.f32 %v1313, %v1313
        %v1334 = vmul.f32 %v1315, %v1315
        %v1335 = vmul.f32 %v1317, %v1317
        %v1336 = vmul.f32 %v1319, %v1319
        %v1337 = vmul.f32 %v1283, %v1321
        %v1338 = vmul.f32 %v1285, %v1322
        %v1339 = vmul.f32 %v1287, %v1323
        %v1340 = vmul.f32 %v1289, %v1324
        %v1341 = vmul.f32 %v1293, %v1325
        %v1342 = vmul.f32 %v1295, %v1326
        %v1343 = vmul.f32 %v1297, %v1327
        %v1344 = vmul.f32 %v1299, %v1328
        %v1345 = vmul.f32 %v1303, %v1329
        %v1346 = vmul.f32 %v1305, %v1330
        %v1347 = vmul.f32 %v1307, %v1331
        %v1348 = vmul.f32 %v1309, %v1332
        %v1349 = vmul.f32 %v1313, %v1333
        %v1350 = vmul.f32 %v1315, %v1334
        %v1351 = vmul.f32 %v1317, %v1335
        %v1352 = vmul.f32 %v1319, %v1336
        %v1353 = vmul.f32 %v1337, 0.044715
        %v1354 = vmul.f32 %v1338, 0.044715
        %v1355 = vmul.f32 %v1339, 0.044715
        %v1356 = vmul.f32 %v1340, 0.044715
        %v1357 = vmul.f32 %v1341, 0.044715
        %v1358 = vmul.f32 %v1342, 0.044715
        %v1359 = vmul.f32 %v1343, 0.044715
        %v1360 = vmul.f32 %v1344, 0.044715
        %v1361 = vmul.f32 %v1345, 0.044715
        %v1362 = vmul.f32 %v1346, 0.044715
        %v1363 = vmul.f32 %v1347, 0.044715
        %v1364 = vmul.f32 %v1348, 0.044715
        %v1365 = vmul.f32 %v1349, 0.044715
        %v1366 = vmul.f32 %v1350, 0.044715
        %v1367 = vmul.f32 %v1351, 0.044715
        %v1368 = vmul.f32 %v1352, 0.044715
        %v1369 = vadd.f32 %v1283, %v1353
        %v1370 = vadd.f32 %v1285, %v1354
        %v1371 = vadd.f32 %v1287, %v1355
        %v1372 = vadd.f32 %v1289, %v1356
        %v1373 = vadd.f32 %v1293, %v1357
        %v1374 = vadd.f32 %v1295, %v1358
        %v1375 = vadd.f32 %v1297, %v1359
        %v1376 = vadd.f32 %v1299, %v1360
        %v1377 = vadd.f32 %v1303, %v1361
        %v1378 = vadd.f32 %v1305, %v1362
        %v1379 = vadd.f32 %v1307, %v1363
        %v1380 = vadd.f32 %v1309, %v1364
        %v1381 = vadd.f32 %v1313, %v1365
        %v1382 = vadd.f32 %v1315, %v1366
        %v1383 = vadd.f32 %v1317, %v1367
        %v1384 = vadd.f32 %v1319, %v1368
        %v1385 = vmul.f32 %v1369, 0.7978846
        %v1386 = vmul.f32 %v1370, 0.7978846
        %v1387 = vmul.f32 %v1371, 0.7978846
        %v1388 = vmul.f32 %v1372, 0.7978846
        %v1389 = vmul.f32 %v1373, 0.7978846
        %v1390 = vmul.f32 %v1374, 0.7978846
        %v1391 = vmul.f32 %v1375, 0.7978846
        %v1392 = vmul.f32 %v1376, 0.7978846
        %v1393 = vmul.f32 %v1377, 0.7978846
        %v1394 = vmul.f32 %v1378, 0.7978846
        %v1395 = vmul.f32 %v1379, 0.7978846
        %v1396 = vmul.f32 %v1380, 0.7978846
        %v1397 = vmul.f32 %v1381, 0.7978846
        %v1398 = vmul.f32 %v1382, 0.7978846
        %v1399 = vmul.f32 %v1383, 0.7978846
        %v1400 = vmul.f32 %v1384, 0.7978846
        %v1401 = vtanh.pop %v1385
        %v1402 = vtanh.pop %v1386
        %v1403 = vtanh.pop %v1387
        %v1404 = vtanh.pop %v1388
        %v1405 = vtanh.pop %v1389
        %v1406 = vtanh.pop %v1390
        %v1407 = vtanh.pop %v1391
        %v1408 = vtanh.pop %v1392
        %v1409 = vtanh.pop %v1393
        %v1410 = vtanh.pop %v1394
        %v1411 = vtanh.pop %v1395
        %v1412 = vtanh.pop %v1396
        %v1413 = vtanh.pop %v1397
        %v1414 = vtanh.pop %v1398
        %v1415 = vtanh.pop %v1399
        %v1416 = vtanh.pop %v1400
        %v1417 = vadd.f32 %v1401, 1.0
        %v1418 = vadd.f32 %v1402, 1.0
        %v1419 = vadd.f32 %v1403, 1.0
        %v1420 = vadd.f32 %v1404, 1.0
        %v1421 = vadd.f32 %v1405, 1.0
        %v1422 = vadd.f32 %v1406, 1.0
        %v1423 = vadd.f32 %v1407, 1.0
        %v1424 = vadd.f32 %v1408, 1.0
        %v1425 = vadd.f32 %v1409, 1.0
        %v1426 = vadd.f32 %v1410, 1.0
        %v1427 = vadd.f32 %v1411, 1.0
        %v1428 = vadd.f32 %v1412, 1.0
        %v1429 = vadd.f32 %v1413, 1.0
        %v1430 = vadd.f32 %v1414, 1.0
        %v1431 = vadd.f32 %v1415, 1.0
        %v1432 = vadd.f32 %v1416, 1.0
        %v1433 = vmul.f32 %v1417, 0.5
        %v1434 = vmul.f32 %v1418, 0.5
        %v1435 = vmul.f32 %v1419, 0.5
        %v1436 = vmul.f32 %v1420, 0.5
        %v1437 = vmul.f32 %v1421, 0.5
        %v1438 = vmul.f32 %v1422, 0.5
        %v1439 = vmul.f32 %v1423, 0.5
        %v1440 = vmul.f32 %v1424, 0.5
        %v1441 = vmul.f32 %v1425, 0.5
        %v1442 = vmul.f32 %v1426, 0.5
        %v1443 = vmul.f32 %v1427, 0.5
        %v1444 = vmul.f32 %v1428, 0.5
        %v1445 = vmul.f32 %v1429, 0.5
        %v1446 = vmul.f32 %v1430, 0.5
        %v1447 = vmul.f32 %v1431, 0.5
        %v1448 = vmul.f32 %v1432, 0.5
        %v1449 = vmul.f32 %v1283, %v1433
        %v1450 = vmul.f32 %v1285, %v1434
        %v1451 = vmul.f32 %v1287, %v1435
        %v1452 = vmul.f32 %v1289, %v1436
        %v1453 = vmul.f32 %v1293, %v1437
        %v1454 = vmul.f32 %v1295, %v1438
        %v1455 = vmul.f32 %v1297, %v1439
        %v1456 = vmul.f32 %v1299, %v1440
        %v1457 = vmul.f32 %v1303, %v1441
        %v1458 = vmul.f32 %v1305, %v1442
        %v1459 = vmul.f32 %v1307, %v1443
        %v1460 = vmul.f32 %v1309, %v1444
        %v1461 = vmul.f32 %v1313, %v1445
        %v1462 = vmul.f32 %v1315, %v1446
        %v1463 = vmul.f32 %v1317, %v1447
        %v1464 = vmul.f32 %v1319, %v1448
        %v1465 = vpack.c.bf16 %v1451, %v1449
        %v1466 = vpack.c.bf16 %v1452, %v1450
        %v1467 = vpack.c.bf16 %v1455, %v1453
        %v1468 = vpack.c.bf16 %v1456, %v1454
        %v1469 = vpack.c.bf16 %v1459, %v1457
        %v1470 = vpack.c.bf16 %v1460, %v1458
        %v1471 = vpack.c.bf16 %v1463, %v1461
        %v1472 = vpack.c.bf16 %v1464, %v1462
        %v1473 = vld [vmem:[%s560] sm:$0xf]
        %v1474 = vld [vmem:[%s560 + $0x4] sm:$0xf]
        %v1475 = vld [vmem:[%s560 + $0x8] sm:$0xf]
        %v1476 = vld [vmem:[%s560 + $0xc] sm:$0xf]
        %v1477 = vld [vmem:[%s560 + $0x10] sm:$0xf]
        %v1478 = vld [vmem:[%s560 + $0x14] sm:$0xf]
        %v1479 = vld [vmem:[%s560 + $0x18] sm:$0xf]
        %v1480 = vld [vmem:[%s560 + $0x1c] sm:$0xf]
        %v1481 = vld [vmem:[%s560 + $0x20] sm:$0xf]
        %v1482 = vld [vmem:[%s560 + $0x24] sm:$0xf]
        %v1483 = vld [vmem:[%s560 + $0x28] sm:$0xf]
        %v1484 = vld [vmem:[%s560 + $0x2c] sm:$0xf]
        %v1485 = vld [vmem:[%s560 + $0x30] sm:$0xf]
        %v1486 = vld [vmem:[%s560 + $0x34] sm:$0xf]
        %v1487 = vld [vmem:[%s560 + $0x38] sm:$0xf]
        %v1488 = vld [vmem:[%s560 + $0x3c] sm:$0xf]
        %v1489 = vld [vmem:[%s560 + $0x40] sm:$0xf]
        %v1490 = vld [vmem:[%s560 + $0x44] sm:$0xf]
        %v1491 = vld [vmem:[%s560 + $0x48] sm:$0xf]
        %v1492 = vld [vmem:[%s560 + $0x4c] sm:$0xf]
        %v1493 = vld [vmem:[%s560 + $0x50] sm:$0xf]
        %v1494 = vld [vmem:[%s560 + $0x54] sm:$0xf]
        %v1495 = vld [vmem:[%s560 + $0x58] sm:$0xf]
        %v1496 = vld [vmem:[%s560 + $0x5c] sm:$0xf]
        %v1497 = vld [vmem:[%s560 + $0x60] sm:$0xf]
        %v1498 = vld [vmem:[%s560 + $0x64] sm:$0xf]
        %v1499 = vld [vmem:[%s560 + $0x68] sm:$0xf]
        %v1500 = vld [vmem:[%s560 + $0x6c] sm:$0xf]
        %v1501 = vld [vmem:[%s560 + $0x70] sm:$0xf]
        %v1502 = vld [vmem:[%s560 + $0x74] sm:$0xf]
        %v1503 = vld [vmem:[%s560 + $0x78] sm:$0xf]
        %v1504 = vld [vmem:[%s560 + $0x7c] sm:$0xf]
        %v1537 = vunpack.c.l.b16 %v1473
        %v1538 = vunpack.c.l.b16 %v1474
        %v1539 = vunpack.c.l.b16 %v1475
        %v1540 = vunpack.c.l.b16 %v1476
        %v1541 = vunpack.c.l.b16 %v1477
        %v1542 = vunpack.c.l.b16 %v1478
        %v1543 = vunpack.c.l.b16 %v1479
        %v1544 = vunpack.c.l.b16 %v1480
        %v1545 = vunpack.c.l.b16 %v1481
        %v1546 = vunpack.c.l.b16 %v1482
        %v1547 = vunpack.c.l.b16 %v1483
        %v1548 = vunpack.c.l.b16 %v1484
        %v1549 = vunpack.c.l.b16 %v1485
        %v1550 = vunpack.c.l.b16 %v1486
        %v1551 = vunpack.c.l.b16 %v1487
        %v1552 = vunpack.c.l.b16 %v1488
        %v1553 = vunpack.c.l.b16 %v1489
        %v1554 = vunpack.c.l.b16 %v1490
        %v1555 = vunpack.c.l.b16 %v1491
        %v1556 = vunpack.c.l.b16 %v1492
        %v1557 = vunpack.c.l.b16 %v1493
        %v1558 = vunpack.c.l.b16 %v1494
        %v1559 = vunpack.c.l.b16 %v1495
        %v1560 = vunpack.c.l.b16 %v1496
        %v1561 = vunpack.c.l.b16 %v1497
        %v1562 = vunpack.c.l.b16 %v1498
        %v1563 = vunpack.c.l.b16 %v1499
        %v1564 = vunpack.c.l.b16 %v1500
        %v1565 = vunpack.c.l.b16 %v1501
        %v1566 = vunpack.c.l.b16 %v1502
        %v1567 = vunpack.c.l.b16 %v1503
        %v1568 = vunpack.c.l.b16 %v1504
        %v1569 = vpack.c.b16 %v1538, %v1537
        %v1570 = vpack.c.b16 %v1540, %v1539
        %v1571 = vpack.c.b16 %v1542, %v1541
        %v1572 = vpack.c.b16 %v1544, %v1543
        %v1573 = vpack.c.b16 %v1546, %v1545
        %v1574 = vpack.c.b16 %v1548, %v1547
        %v1575 = vpack.c.b16 %v1550, %v1549
        %v1576 = vpack.c.b16 %v1552, %v1551
        %v1577 = vpack.c.b16 %v1554, %v1553
        %v1578 = vpack.c.b16 %v1556, %v1555
        %v1579 = vpack.c.b16 %v1558, %v1557
        %v1580 = vpack.c.b16 %v1560, %v1559
        %v1581 = vpack.c.b16 %v1562, %v1561
        %v1582 = vpack.c.b16 %v1564, %v1563
        %v1583 = vpack.c.b16 %v1566, %v1565
        %v1584 = vpack.c.b16 %v1568, %v1567
        %1601 = vmatprep.subr.bf16.mxu0 0
        %1602 = vmatpush1.bf16.msra.mxu0 %v1576
        %1603 = vmatprep.subr.bf16.mxu0 0
        %1604 = vmatpush1.bf16.msra.mxu0 %v1575
        %1605 = vmatprep.subr.bf16.mxu0 0
        %1606 = vmatpush1.bf16.msra.mxu0 %v1574
        %1607 = vmatprep.subr.bf16.mxu0 0
        %1608 = vmatpush1.bf16.msra.mxu0 %v1573
        %1609 = vmatprep.subr.bf16.mxu0 0
        %1610 = vmatpush1.bf16.msra.mxu0 %v1572
        %1611 = vmatprep.subr.bf16.mxu0 0
        %1612 = vmatpush1.bf16.msra.mxu0 %v1571
        %1613 = vmatprep.subr.bf16.mxu0 0
        %1614 = vmatpush1.bf16.msra.mxu0 %v1570
        %1615 = vmatprep.subr.bf16.mxu0 0
        %1616 = vmatpush1.bf16.msra.mxu0 %v1569
        %1617 = vmatprep.subr.bf16.mxu0 0
        %1618 = vmatpush2.bf16.msra.mxu0 %v1584
        %1619 = vmatprep.subr.bf16.mxu0 0
        %1620 = vmatpush2.bf16.msra.mxu0 %v1583
        %1621 = vmatprep.subr.bf16.mxu0 0
        %1622 = vmatpush2.bf16.msra.mxu0 %v1582
        %1623 = vmatprep.subr.bf16.mxu0 0
        %1624 = vmatpush2.bf16.msra.mxu0 %v1581
        %1625 = vmatprep.subr.bf16.mxu0 0
        %1626 = vmatpush2.bf16.msra.mxu0 %v1580
        %1627 = vmatprep.subr.bf16.mxu0 0
        %1628 = vmatpush2.bf16.msra.mxu0 %v1579
        %1629 = vmatprep.subr.bf16.mxu0 0
        %1630 = vmatpush2.bf16.msra.mxu0 %v1578
        %1631 = vmatprep.subr.bf16.mxu0 0
        %1632 = vmatpush2.bf16.msra.mxu0 %v1577
        %1633 = vmatprep.mubr.bf16.mxu0 %v1466
        %1634 = vmatmul.mubr.bf16.gmra.mxu0 %v1465
        %v1635 = vpop.f32.mrf.mxu0
        %v1636 = vadd.f32 0.0, %v1635
        %v1637 = vpop.f32.mrf.mxu0
        %v1638 = vpop.f32.mrf.mxu0
        %v1639 = vadd.f32 0.0, %v1638
        %v1640 = vpop.f32.mrf.mxu0
        %1641 = vmatprep.mubr.bf16.mxu0 %v1468
        %1642 = vmatmul.mubr.bf16.gmra.mxu0 %v1467
        %v1643 = vpop.f32.mrf.mxu0
        %v1644 = vadd.f32 0.0, %v1643
        %v1645 = vpop.f32.mrf.mxu0
        %v1646 = vpop.f32.mrf.mxu0
        %v1647 = vadd.f32 0.0, %v1646
        %v1648 = vpop.f32.mrf.mxu0
        %1649 = vmatprep.mubr.bf16.mxu0 %v1470
        %1650 = vmatmul.mubr.bf16.gmra.mxu0 %v1469
        %v1651 = vpop.f32.mrf.mxu0
        %v1652 = vadd.f32 0.0, %v1651
        %v1653 = vpop.f32.mrf.mxu0
        %v1654 = vpop.f32.mrf.mxu0
        %v1655 = vadd.f32 0.0, %v1654
        %v1656 = vpop.f32.mrf.mxu0
        %1657 = vmatprep.mubr.bf16.mxu0 %v1472
        %1658 = vmatmul.mubr.bf16.gmra.mxu0 %v1471
        %v1659 = vpop.f32.mrf.mxu0
        %v1660 = vadd.f32 0.0, %v1659
        %v1661 = vpop.f32.mrf.mxu0
        %v1662 = vpop.f32.mrf.mxu0
        %v1663 = vadd.f32 0.0, %v1662
        %v1664 = vpop.f32.mrf.mxu0
        %1665 = vdwg.mxu0
        // Predicated region
        $region93: #{tpu_custom_call.1} parent=67 // pred_check
          %p1666 = pneg %p639
        $region94: #{tpu_custom_call.1} parent=67 // pred_check_branch
          %1668 = sbr.rel (%p1666) target = $region96
        $region95: #{tpu_custom_call.1} parent=67 // pred_region
          %1669 = vst [vmem:[#allocation3] sm:$0xff] %v1636
          %1670 = vst [vmem:[#allocation3 + $0x8] sm:$0xff] %v1639
          %1671 = vst [vmem:[#allocation3 + $0x10] sm:$0xff] %v1644
          %1672 = vst [vmem:[#allocation3 + $0x18] sm:$0xff] %v1647
          %1673 = vst [vmem:[#allocation3 + $0x20] sm:$0xff] %v1652
          %1674 = vst [vmem:[#allocation3 + $0x28] sm:$0xff] %v1655
          %1675 = vst [vmem:[#allocation3 + $0x30] sm:$0xff] %v1660
          %1676 = vst [vmem:[#allocation3 + $0x38] sm:$0xff] %v1663
        $region96: #{tpu_custom_call.1} parent=67 // pred_fallthru
          _
        %p1677 = scmp.gt.s32.totalorder %s45, 0
        // Predicated region
        $region97: #{tpu_custom_call.1} parent=67 // pred_check
          %p1678 = pneg %p1677
        $region98: #{tpu_custom_call.1} parent=67 // pred_check_branch
          %1680 = sbr.rel (%p1678) target = $region100
        $region99: #{tpu_custom_call.1} parent=67 // pred_region
          %v1681 = vld [vmem:[#allocation3] sm:$0xff]
          %v1682 = vld [vmem:[#allocation3 + $0x8] sm:$0xff]
          %v1683 = vld [vmem:[#allocation3 + $0x10] sm:$0xff]
          %v1684 = vld [vmem:[#allocation3 + $0x18] sm:$0xff]
          %v1685 = vld [vmem:[#allocation3 + $0x20] sm:$0xff]
          %v1686 = vld [vmem:[#allocation3 + $0x28] sm:$0xff]
          %v1687 = vld [vmem:[#allocation3 + $0x30] sm:$0xff]
          %v1688 = vld [vmem:[#allocation3 + $0x38] sm:$0xff]
          %v1689 = vadd.f32 %v1681, %v1636
          %v1690 = vadd.f32 %v1682, %v1639
          %v1691 = vadd.f32 %v1683, %v1644
          %v1692 = vadd.f32 %v1684, %v1647
          %v1693 = vadd.f32 %v1685, %v1652
          %v1694 = vadd.f32 %v1686, %v1655
          %v1695 = vadd.f32 %v1687, %v1660
          %v1696 = vadd.f32 %v1688, %v1663
          %1697 = vst [vmem:[#allocation3] sm:$0xff] %v1689
          %1698 = vst [vmem:[#allocation3 + $0x8] sm:$0xff] %v1690
          %1699 = vst [vmem:[#allocation3 + $0x10] sm:$0xff] %v1691
          %1700 = vst [vmem:[#allocation3 + $0x18] sm:$0xff] %v1692
          %1701 = vst [vmem:[#allocation3 + $0x20] sm:$0xff] %v1693
          %1702 = vst [vmem:[#allocation3 + $0x28] sm:$0xff] %v1694
          %1703 = vst [vmem:[#allocation3 + $0x30] sm:$0xff] %v1695
          %1704 = vst [vmem:[#allocation3 + $0x38] sm:$0xff] %v1696
        $region100: #{tpu_custom_call.1} parent=67 // pred_fallthru
          _
        %p1705 = scmp.eq.s32.totalorder %s45, 1
        // Predicated region
        $region101: #{tpu_custom_call.1} parent=67 // pred_check
          %p1706 = pneg %p1705
        $region102: #{tpu_custom_call.1} parent=67 // pred_check_branch
          %1708 = sbr.rel (%p1706) target = $region104
        $region103: #{tpu_custom_call.1} parent=67 // pred_region
          %v1709 = vld [vmem:[#allocation3] sm:$0xff]
          %v1710 = vld [vmem:[#allocation3 + $0x8] sm:$0xff]
          %v1711 = vld [vmem:[#allocation3 + $0x10] sm:$0xff]
          %v1712 = vld [vmem:[#allocation3 + $0x18] sm:$0xff]
          %v1713 = vld [vmem:[#allocation3 + $0x20] sm:$0xff]
          %v1714 = vld [vmem:[#allocation3 + $0x28] sm:$0xff]
          %v1715 = vld [vmem:[#allocation3 + $0x30] sm:$0xff]
          %v1716 = vld [vmem:[#allocation3 + $0x38] sm:$0xff]
          %v1717 = vld [vmem:[%s11] sm:$0x1]
          %v1719 = vlaneseq
          %v1720 = vshrl.u32 %v1719, 7
          %v1721 = vsub.s32 0, %v1720
          %v1722 = vrot.slane %v1717, %v1721
          %v1724 = vadd.f32 %v1709, %v1722
          %v1725 = vadd.f32 %v1710, %v1722
          %v1726 = vadd.f32 %v1711, %v1722
          %v1727 = vadd.f32 %v1712, %v1722
          %v1728 = vadd.f32 %v1713, %v1722
          %v1729 = vadd.f32 %v1714, %v1722
          %v1730 = vadd.f32 %v1715, %v1722
          %v1731 = vadd.f32 %v1716, %v1722
          %v1732 = vpack.c.bf16 %v1725, %v1724
          %v1733 = vpack.c.bf16 %v1727, %v1726
          %v1734 = vpack.c.bf16 %v1729, %v1728
          %v1735 = vpack.c.bf16 %v1731, %v1730
          %v1740 = vunpack.c.l.b16 %v1732
          %v1741 = vunpack.c.h.b16 %v1732
          %v1742 = vunpack.c.l.b16 %v1733
          %v1743 = vunpack.c.h.b16 %v1733
          %v1744 = vunpack.c.l.b16 %v1734
          %v1745 = vunpack.c.h.b16 %v1734
          %v1746 = vunpack.c.l.b16 %v1735
          %v1747 = vunpack.c.h.b16 %v1735
          %v1748 = vpack.c.b16 %v1740, %v1740
          %v1749 = vpack.c.b16 %v1741, %v1741
          %v1750 = vpack.c.b16 %v1742, %v1742
          %v1751 = vpack.c.b16 %v1743, %v1743
          %v1752 = vpack.c.b16 %v1744, %v1744
          %v1753 = vpack.c.b16 %v1745, %v1745
          %v1754 = vpack.c.b16 %v1746, %v1746
          %v1755 = vpack.c.b16 %v1747, %v1747
          %1764 = vst [vmem:[%s619] sm:$0xf] %v1748
          %1765 = vst [vmem:[%s619 + $0x4] sm:$0xf] %v1749
          %1766 = vst [vmem:[%s619 + $0x8] sm:$0xf] %v1750
          %1767 = vst [vmem:[%s619 + $0xc] sm:$0xf] %v1751
          %1768 = vst [vmem:[%s619 + $0x10] sm:$0xf] %v1752
          %1769 = vst [vmem:[%s619 + $0x14] sm:$0xf] %v1753
          %1770 = vst [vmem:[%s619 + $0x18] sm:$0xf] %v1754
          %1771 = vst [vmem:[%s619 + $0x1c] sm:$0xf] %v1755
        $region104: #{tpu_custom_call.1} parent=67 // pred_fallthru
          _
        %s1772 = sand.u32 %s337, 1
        %s1773 = scalar_lea.sflag [#allocation6], %s1772
        %s1774 = sand.u32 %s337, 1
        %s1775 = smul.addr %s1774, 32
        %s1776 = scalar_lea.vmem [#allocation13], %s1775
        %s1777 = sand.u32 %s363, 1
        %s1778 = scalar_lea.sflag [#allocation15], %s1777
        %s1779 = sand.u32 %s363, 1
        %s1780 = smul.addr %s1779, 64
        %s1781 = scalar_lea.vmem [#allocation14], %s1780
        // Predicated region
        $region105: #{tpu_custom_call.1} parent=67 // pred_check
          %p1782 = pneg %p347
        $region106: #{tpu_custom_call.1} parent=67 // pred_check_branch
          %1784 = sbr.rel (%p1782) target = $region108
        $region107: #{tpu_custom_call.1} parent=67 // pred_region
          %s1785 = smul.u32 8, %s44
          %s1787 = ssub.s32 512, 512
          %1788 = vsyncadd %s1773, %s1787
          %s1789 = smul.addr %s1785, 64
          %s1790 = scalar_lea.hbm %s12, %s1789
          %s1791 = sshll.u32 %s1776, 4
          %s1792 = int_to_ptr.vmem [resolvable:$true] %s1791
          %1797 = dma.vmem_to_hbm [thread:$0]  %s1792, 512, %s1790, %s1773, 64, 64, 4
        $region108: #{tpu_custom_call.1} parent=67 // pred_fallthru
          _
        // Predicated region
        $region109: #{tpu_custom_call.1} parent=67 // pred_check
          %p1798 = pneg %p373
        $region110: #{tpu_custom_call.1} parent=67 // pred_check_branch
          %1800 = sbr.rel (%p1798) target = $region112
        $region111: #{tpu_custom_call.1} parent=67 // pred_region
          %s1801 = smul.u32 8, %s44
          %s1803 = ssub.s32 1024, 1024
          %1804 = vsyncadd %s1778, %s1803
          %s1805 = smul.addr %s1801, 128
          %s1806 = scalar_lea.hbm %s13, %s1805
          %s1807 = sshll.u32 %s1781, 4
          %s1808 = int_to_ptr.vmem [resolvable:$true] %s1807
          %1813 = dma.vmem_to_hbm [thread:$0]  %s1808, 1024, %s1806, %s1778, 128, 128, 8
        $region112: #{tpu_custom_call.1} parent=67 // pred_fallthru
          _
      $region68: #{tpu_custom_call.1} parent=5 // pred_fallthru
        _
      %p1814 = scmp.le.s32.totalorder 2, %s35
      // Predicated region
      $region113: #{tpu_custom_call.1} parent=5 // pred_check
        %p1815 = pneg %p1814
      $region114: #{tpu_custom_call.1} parent=5 // pred_check_branch
        %1817 = sbr.rel (%p1815) target = $region116
      $region115: #{tpu_custom_call.1} parent=5 // pred_region
        %s1818 = ssub.s32 %s35, 2
        // Predicated region
        $region117: #{tpu_custom_call.1} parent=115 // pred_check
          %p1819 = pneg %p353
        $region118: #{tpu_custom_call.1} parent=115 // pred_check_branch
          %1821 = sbr.rel (%p1819) target = $region120
        $region119: #{tpu_custom_call.1} parent=115 // pred_region
          %s1822 = sand.u32 %s338, 1
          %s1823 = scalar_lea.sflag [#allocation6], %s1822
          %s1824 = sand.u32 %s338, 1
          %s1825 = smul.addr %s1824, 32
          %s1826 = scalar_lea.vmem [#allocation13], %s1825
          %1827 = dma.done %s1823, 512
        $region120: #{tpu_custom_call.1} parent=115 // pred_fallthru
          _
        // Predicated region
        $region121: #{tpu_custom_call.1} parent=115 // pred_check
          %p1828 = pneg %p379
        $region122: #{tpu_custom_call.1} parent=115 // pred_check_branch
          %1830 = sbr.rel (%p1828) target = $region124
        $region123: #{tpu_custom_call.1} parent=115 // pred_region
          %s1831 = sand.u32 %s364, 1
          %s1832 = scalar_lea.sflag [#allocation15], %s1831
          %s1833 = sand.u32 %s364, 1
          %s1834 = smul.addr %s1833, 64
          %s1835 = scalar_lea.vmem [#allocation14], %s1834
          %1836 = dma.done %s1832, 1024
        $region124: #{tpu_custom_call.1} parent=115 // pred_fallthru
          _
      $region116: #{tpu_custom_call.1} parent=5 // pred_fallthru
        _
    $region6: #{tpu_custom_call.1} parent=1 // loop_footer
      %s39 = sadd.s32 1, %s35
    $region7: #{tpu_custom_call.1} parent=1 // loop_footer_branch
      %34 = sbr.rel target = $region3
    $region8: #{tpu_custom_call.1} parent=1 // loop_exit
      _
    %1837 = vsyncpa [#allocation5], 1
    %s1838 = scalar_lea.sflag [#allocation5], 1
    %1839 = vsyncpa %s1838, 1
    %1840 = vsyncpa [#allocation8], 1
    %s1841 = scalar_lea.sflag [#allocation8], 1
    %1842 = vsyncpa %s1841, 1
    %1843 = vsyncpa [#allocation11], 1
    %s1844 = scalar_lea.sflag [#allocation11], 1
    %1845 = vsyncpa %s1844, 1
    %1846 = vsyncpa [#allocation6], 1
    %s1847 = scalar_lea.sflag [#allocation6], 1
    %1848 = vsyncpa %s1847, 1
    %1849 = vsyncpa [#allocation15], 1
    %s1850 = scalar_lea.sflag [#allocation15], 1
    %1851 = vsyncpa %s1850, 1

</llo_original>
